<compile_context>
chip_gen: v5e
topology: v5e:2x2
jax: 0.10.0
libtpu: 0.0.40
codegen_flags: <defaults>
</compile_context>

<pallas_src>
import math

import jax
import jax.numpy as jnp
import numpy as np
from jax.experimental import pallas as pl
from jax.experimental.pallas import tpu as pltpu

_K, _S, _P = 8, 4, 2                    # kernel / stride / padding of the block
_VMEM_LIMIT_BYTES = 48 * 1024 * 1024    # fits v7x (64 MiB phys) and v5e/v6e
_VMEM_STREAM_BUDGET = 24 * 1024 * 1024  # budget for double-buffered M-streams


# ----------------------------------------------------------------------------
# Small helpers.
# ----------------------------------------------------------------------------
def _round_up(x, m):
    return (x + m - 1) // m * m


def _row(v):
    return jnp.asarray(v, jnp.float32).reshape(1, -1)


def _scalar(v):
    return jnp.asarray(v, jnp.float32).reshape(1, 1)


def _prelu(z, alpha):
    return jnp.where(z > 0, z, alpha * z)


def _pad_cols(p, kp):
    """Zero-pad the contracting dim of the patch matrix to the weight's K."""
    return p if p.shape[1] == kp else jnp.pad(p, ((0, 0), (0, kp - p.shape[1])))


def _pad_rows_to(w, mult=128):
    """Zero-pad the weight's contracting dim to a multiple of `mult`."""
    kp = _round_up(w.shape[0], mult)
    return w if kp == w.shape[0] else jnp.pad(w, ((0, kp - w.shape[0]), (0, 0)))


# ----------------------------------------------------------------------------
# GEMM "bodies": shared by the Pallas kernels and the plain-jnp reference path,
# so check-1 validates the kernel apples-to-apples.  All bodies accumulate in
# f32; rowblk residuals arrive in bf16 and are upcast here.
# ----------------------------------------------------------------------------
def _body_down1_conv1(p, w0, b0, a0, w1, b1, a1):
    """down1 = conv(8,4,2)+PReLU, with conv1 = 1x1 conv + PReLU fused (bf16 MXU)."""
    z = jnp.dot(p, w0, preferred_element_type=jnp.float32) + b0
    z = _prelu(z, a0)
    z = jnp.dot(z.astype(jnp.bfloat16), w1,
                preferred_element_type=jnp.float32) + b1
    return _prelu(z, a1)


def _body_deconv_prelu(p, w, b, a):
    """Plain GEMM + bias + PReLU (up_conv1, and building block for the gates)."""
    z = jnp.dot(p, w, preferred_element_type=jnp.float32) + b
    return _prelu(z, a)


def _body_up1_gate(p, w, b, a, x_f):
    """l00 = PReLU(up_1(p1)) ; out_la = x + 0.1 * relu(x - l00) * x."""
    l00 = _body_deconv_prelu(p, w, b, a)
    x_f = x_f.astype(jnp.float32)
    return x_f + 0.1 * jnp.maximum(x_f - l00, 0.0) * x_f


def _body_conv_sub(p, w, b, a, r):
    """l0 = PReLU(up_conv2(h0)) ; out = l0 - out_la."""
    return _body_deconv_prelu(p, w, b, a) - r.astype(jnp.float32)


def _body_final_gate(p, w, b, a, h0_f):
    """h1 = PReLU(up_conv3(.)) ; h3 = h0 + 0.2 * relu(h1) * h0."""
    h1 = _body_deconv_prelu(p, w, b, a)
    h0_f = h0_f.astype(jnp.float32)
    return h0_f + 0.2 * jnp.maximum(h1, 0.0) * h0_f


# ----------------------------------------------------------------------------
# Tiling choice: fit a VMEM budget (v7x-safe), keep >=2 grid steps when M
# allows (2 TensorCores on v7x), and prefer tiles that divide M exactly so the
# pad / slice HBM copies vanish.
# ----------------------------------------------------------------------------
def _choose_tiling(M, row_bytes, budget_bytes=_VMEM_STREAM_BUDGET, tm_cap=2048):
    m8 = _round_up(max(M, 1), 8)
    tm_budget = max(8, min(tm_cap, (budget_bytes // max(2 * row_bytes, 1)) // 8 * 8))
    n_steps = max(1, -(-m8 // tm_budget))
    if m8 >= 16:
        n_steps = max(n_steps, 2)          # keep both TCs busy on v7x
    tm_eff = _round_up(-(-m8 // n_steps), 8)
    n_steps = -(-m8 // tm_eff)
    return tm_eff, tm_eff * n_steps


# ----------------------------------------------------------------------------
# Generic fused-GEMM pallas_call wrapper.
# ----------------------------------------------------------------------------
def fused_gemm(body, patches, operands, out_n, out_dtype=jnp.bfloat16,
               use_pallas=True):
    """Run `body(patch_tile, *operand_values)` over M-tiles of `patches`.

    operands: list of (array, kind) with kind in
        "const"  -- whole-array VMEM operand (weight matrix, bias row, ...)
        "scalar" -- (1, 1) f32 scalar routed through SMEM (PReLU alpha)
        "rowblk" -- (M, width) bf16 operand tiled along M like the output
    The body accumulates in f32; the result is cast to `out_dtype` at the store.
    """
    M, K = patches.shape

    if not use_pallas:  # plain-jnp reference of exactly the same math + casts
        vals = [a[0, 0] if kind == "scalar" else a for a, kind in operands]
        return body(patches, *vals).astype(out_dtype)

    out_bytes = np.dtype(out_dtype).itemsize
    row_bytes = 2 * K + out_bytes * out_n
    row_bytes += sum(2 * a.shape[1] for a, kind in operands if kind == "rowblk")
    tm_eff, m_total = _choose_tiling(M, row_bytes)

    m_pad = m_total - M
    if m_pad:
        patches = jnp.pad(patches, ((0, m_pad), (0, 0)))
        operands = [
            (jnp.pad(a, ((0, m_pad), (0, 0))) if kind == "rowblk" else a, kind)
            for a, kind in operands
        ]

    # NOTE: on v5e/v6e (128 MiB VMEM) a deeper patch pipeline
    # (pipeline_mode=pl.Buffered(3)) could hide DMA further; not applied here
    # to keep one code path that also fits v7x's 64 MiB.
    in_specs = [pl.BlockSpec((tm_eff, K), lambda i: (i, 0))]
    args = [patches]
    kinds = []
    for a, kind in operands:
        kinds.append(kind)
        args.append(a)
        if kind == "scalar":
            in_specs.append(pl.BlockSpec(memory_space=pltpu.MemorySpace.SMEM))
        elif kind == "rowblk":
            in_specs.append(pl.BlockSpec((tm_eff, a.shape[1]), lambda i: (i, 0)))
        else:  # "const": resident full array, same block for every grid step
            in_specs.append(
                pl.BlockSpec(a.shape, lambda i, nd=a.ndim: (0,) * nd))

    def kernel(*refs):
        o_ref = refs[-1]
        vals = [refs[0][...]]
        for r, kind in zip(refs[1:-1], kinds):
            vals.append(r[0, 0] if kind == "scalar" else r[...])
        o_ref[...] = body(*vals).astype(o_ref.dtype)

    out = pl.pallas_call(
        kernel,
        out_shape=jax.ShapeDtypeStruct((m_total, out_n), out_dtype),
        grid=(m_total // tm_eff,),
        in_specs=in_specs,
        out_specs=pl.BlockSpec((tm_eff, out_n), lambda i: (i, 0)),
        compiler_params=pltpu.CompilerParams(
            dimension_semantics=("parallel",),
            vmem_limit_bytes=_VMEM_LIMIT_BYTES),
    )(*args)
    return out[:M] if m_pad else out


# ----------------------------------------------------------------------------
# Layout glue (pure indexing / reshapes feeding the Pallas GEMMs).
# ----------------------------------------------------------------------------
def im2col(x, k, s, p):
    """(B, H, W, C) -> (B*Ho*Wo, k*k*C) patches, per-patch ordering (ky, kx, c)."""
    B, H, W, C = x.shape
    xp = jnp.pad(x, ((0, 0), (p, p), (p, p), (0, 0)))
    Ho = (H + 2 * p - k) // s + 1
    Wo = (W + 2 * p - k) // s + 1
    cols = []
    for ky in range(k):
        for kx in range(k):
            cols.append(xp[:, ky:ky + s * Ho:s, kx:kx + s * Wo:s, :])
    patches = jnp.stack(cols, axis=3)                  # (B, Ho, Wo, k*k, C)
    return patches.reshape(B * Ho * Wo, k * k * C), (B, Ho, Wo)


def conv_wmat(w):
    """PyTorch Conv2d weight (Cout, Cin, k, k) -> GEMM matrix (k*k*Cin, Cout)."""
    return jnp.transpose(w, (2, 3, 1, 0)).reshape(-1, w.shape[0])


def _subpixel_geometry(k, s, p):
    us = sorted({(r + p - kh) // s for r in range(s) for kh in range(k)
                 if (r + p - kh) % s == 0})
    u_lo, u_hi = us[0], us[-1]
    assert -u_lo == u_hi, "expected the symmetric case (k = 2s, p = s // 2)"
    win = u_hi - u_lo + 1
    kh_idx = np.zeros((win, s), np.int32)
    mask = np.zeros((win, s), np.float32)
    for ui in range(win):
        for r in range(s):
            kh = r + p - (u_lo + ui) * s
            if 0 <= kh < k:
                kh_idx[ui, r] = kh
                mask[ui, r] = 1.0
    return win, -u_lo, kh_idx, mask


_WIN, _DPAD, _KH_IDX, _MASK = _subpixel_geometry(_K, _S, _P)


def deconv_subpixel_wmat(w_t, k=_K, s=_S, p=_P):
    """ConvTranspose2d weight (Cin, Cout, k, k) -> sub-pixel GEMM matrix.

    The deconv becomes: im2col(x, _WIN, stride=1, _DPAD) @ wmat, followed by
    depth-to-space(s) of the (s*s*Cout)-wide output (phase-major columns).
    """
    Cin = w_t.shape[0]
    g = w_t[:, :, _KH_IDX[:, :, None, None], _KH_IDX[None, None, :, :]]
    g = g * jnp.asarray(_MASK[:, :, None, None] * _MASK[None, None, :, :])
    g = jnp.transpose(g, (2, 4, 0, 3, 5, 1))           # (uh, uw, ci, rh, rw, co)
    return g.reshape(_WIN * _WIN * Cin, s * s * w_t.shape[1])


def depth_to_space(y_folded, B, Hb, Wb, s, C):
    y = y_folded.reshape(B, Hb, Wb, s, s, C)
    y = jnp.transpose(y, (0, 1, 3, 2, 4, 5))
    return y.reshape(B, Hb * s, Wb * s, C)


def space_to_depth(x, s):
    B, H, W, C = x.shape
    y = x.reshape(B, H // s, s, W // s, s, C)
    y = jnp.transpose(y, (0, 1, 3, 2, 4, 5))
    return y.reshape(B * (H // s) * (W // s), s * s * C)


# ----------------------------------------------------------------------------
# Weight preprocessing — hoisted, run ONCE per parameter set (not per forward).
# ----------------------------------------------------------------------------
def prepare_params(params):
    bf16 = jnp.bfloat16
    nphase = _S * _S
    return {
        "w_d1": _pad_rows_to(conv_wmat(params["w_d1"])).astype(bf16),
        "b_d1": _row(params["b_d1"]), "a_d1": _scalar(params["a_d1"]),
        "w_c1": params["w_c1"][:, :, 0, 0].T.astype(bf16),
        "b_c1": _row(params["b_c1"]), "a_c1": _scalar(params["a_c1"]),
        "w_u1": _pad_rows_to(deconv_subpixel_wmat(params["w_u1"])).astype(bf16),
        "b_u1": _row(jnp.tile(params["b_u1"], nphase)),
        "a_u1": _scalar(params["a_u1"]),
        "w_uc1": _pad_rows_to(deconv_subpixel_wmat(params["w_uc1"])).astype(bf16),
        "b_uc1": _row(jnp.tile(params["b_uc1"], nphase)),
        "a_uc1": _scalar(params["a_uc1"]),
        "w_uc2": _pad_rows_to(conv_wmat(params["w_uc2"])).astype(bf16),
        "b_uc2": _row(params["b_uc2"]), "a_uc2": _scalar(params["a_uc2"]),
        "w_uc3": _pad_rows_to(deconv_subpixel_wmat(params["w_uc3"])).astype(bf16),
        "b_uc3": _row(jnp.tile(params["b_uc3"], nphase)),
        "a_uc3": _scalar(params["a_uc3"]),
    }


# ----------------------------------------------------------------------------
# FeedbackBlockv2_2 forward (NHWC internally, NCHW at the PyTorch boundary).
# ----------------------------------------------------------------------------
def feedback_block_v2_2(x_nchw, prep, use_pallas=True):
    f32, bf16 = jnp.float32, jnp.bfloat16
    x_in = jnp.transpose(x_nchw, (0, 2, 3, 1)).astype(bf16)     # NCHW -> NHWC
    B = x_in.shape[0]
    nf = prep["b_c1"].shape[1]
    nphase = _S * _S

    def gemm(body, patches, wname, operands, out_n, out_dtype):
        p = _pad_cols(patches.astype(bf16), prep[wname].shape[0])
        return fused_gemm(body, p, [(prep[wname], "const")] + operands, out_n,
                          out_dtype=out_dtype, use_pallas=use_pallas)

    # -- down1: conv(8,4,2)+PReLU, with conv1 (1x1 conv + PReLU) fused --------
    p0, (_, Ho, Wo) = im2col(x_in, _K, _S, _P)
    x = gemm(
        _body_down1_conv1, p0, "w_d1",
        [(prep["b_d1"], "const"), (prep["a_d1"], "scalar"),
         (prep["w_c1"], "const"), (prep["b_c1"], "const"),
         (prep["a_c1"], "scalar")],
        out_n=nf, out_dtype=bf16,
    ).reshape(B, Ho, Wo, nf)

    # -- avgpool_1 (4, 4, 0) ---------------------------------------------------
    assert Ho % _S == 0 and Wo % _S == 0
    Hb, Wb = Ho // _S, Wo // _S
    p1 = x.astype(f32).reshape(B, Hb, _S, Wb, _S, nf).mean(axis=(2, 4)).astype(bf16)

    # -- up_1: sub-pixel deconv(8,4,2)+PReLU, feedback gate fused --------------
    #    out_la = x + 0.1 * relu(x - l00) * x     (in the phase-folded layout)
    pu1, _ = im2col(p1, _WIN, 1, _DPAD)
    out_la_f = gemm(
        _body_up1_gate, pu1, "w_u1",
        [(prep["b_u1"], "const"), (prep["a_u1"], "scalar"),
         (space_to_depth(x, _S), "rowblk")],
        out_n=nphase * nf, out_dtype=bf16,
    )
    out_la = depth_to_space(out_la_f, B, Hb, Wb, _S, nf)        # (B, Ho, Wo, nf)

    # -- up_conv1: sub-pixel deconv(8,4,2)+PReLU -> h0 -------------------------
    puc1, _ = im2col(out_la, _WIN, 1, _DPAD)
    h0_f = gemm(
        _body_deconv_prelu, puc1, "w_uc1",
        [(prep["b_uc1"], "const"), (prep["a_uc1"], "scalar")],
        out_n=nphase * nf, out_dtype=bf16,
    )
    h0 = depth_to_space(h0_f, B, Ho, Wo, _S, nf)                # (B, 4Ho, 4Wo, nf)

    # -- up_conv2: conv(8,4,2)+PReLU, "l0 - out_la" fused ----------------------
    puc2, _ = im2col(h0, _K, _S, _P)
    diff = gemm(
        _body_conv_sub, puc2, "w_uc2",
        [(prep["b_uc2"], "const"), (prep["a_uc2"], "scalar"),
         (out_la.reshape(B * Ho * Wo, nf), "rowblk")],
        out_n=nf, out_dtype=bf16,
    ).reshape(B, Ho, Wo, nf)

    # -- up_conv3: sub-pixel deconv(8,4,2)+PReLU, final gate fused -------------
    #    h3 = h0 + 0.2 * relu(h1) * h0            (in the phase-folded layout)
    puc3, _ = im2col(diff, _WIN, 1, _DPAD)
    h3_f = gemm(
        _body_final_gate, puc3, "w_uc3",
        [(prep["b_uc3"], "const"), (prep["a_uc3"], "scalar"),
         (h0_f, "rowblk")],
        out_n=nphase * nf, out_dtype=f32,
    )
    h3 = depth_to_space(h3_f, B, Ho, Wo, _S, nf)
    return jnp.transpose(h3, (0, 3, 1, 2))                      # NHWC -> NCHW


# ----------------------------------------------------------------------------
# Pure-JAX f32 reference mirroring the PyTorch forward op-by-op.
# ----------------------------------------------------------------------------
def feedback_block_v2_2_lax(x_nchw, params):
    hi = jax.lax.Precision.HIGHEST

    def prelu(v, a):
        return jnp.where(v > 0, v, a * v)

    def conv(v, w, b, s, p):
        y = jax.lax.conv_general_dilated(
            v, w, window_strides=(s, s), padding=[(p, p), (p, p)],
            dimension_numbers=("NCHW", "OIHW", "NCHW"), precision=hi)
        return y + b[None, :, None, None]

    def deconv(v, w_t, b, k, s, p):
        w = jnp.transpose(w_t, (1, 0, 2, 3))[:, :, ::-1, ::-1]
        y = jax.lax.conv_general_dilated(
            v, w, window_strides=(1, 1), padding=[(k - 1 - p, k - 1 - p)] * 2,
            lhs_dilation=(s, s),
            dimension_numbers=("NCHW", "OIHW", "NCHW"), precision=hi)
        return y + b[None, :, None, None]

    x = prelu(conv(x_nchw, params["w_d1"], params["b_d1"], _S, _P), params["a_d1"])
    x = prelu(conv(x, params["w_c1"], params["b_c1"], 1, 0), params["a_c1"])
    B, C, H, W = x.shape
    p1 = x.reshape(B, C, H // _S, _S, W // _S, _S).mean(axis=(3, 5))
    l00 = prelu(deconv(p1, params["w_u1"], params["b_u1"], _K, _S, _P),
                params["a_u1"])
    out_la = x + 0.1 * (jnp.maximum(x - l00, 0.0) * x)
    h0 = prelu(deconv(out_la, params["w_uc1"], params["b_uc1"], _K, _S, _P),
               params["a_uc1"])
    l0 = prelu(conv(h0, params["w_uc2"], params["b_uc2"], _S, _P),
               params["a_uc2"])
    h1 = prelu(deconv(l0 - out_la, params["w_uc3"], params["b_uc3"], _K, _S, _P),
               params["a_uc3"])
    return h0 + 0.2 * (jnp.maximum(h1, 0.0) * h0)


# ----------------------------------------------------------------------------
# Deterministic parameter init (shapes follow the PyTorch module).
# ----------------------------------------------------------------------------
def init_params(key, in_filter, num_filter, k=_K):
    ks = jax.random.split(key, 12)

    def uni(kk, shape, fan_in):
        b = 1.0 / math.sqrt(fan_in)
        return jax.random.uniform(kk, shape, jnp.float32, -b, b)

    nf = num_filter
    return {
        "w_d1": uni(ks[0], (nf, in_filter, k, k), in_filter * k * k),
        "b_d1": uni(ks[1], (nf,), in_filter * k * k),
        "a_d1": jnp.float32(0.25),
        "w_c1": uni(ks[2], (nf, nf, 1, 1), nf),
        "b_c1": uni(ks[3], (nf,), nf),
        "a_c1": jnp.float32(0.20),
        "w_u1": uni(ks[4], (nf, nf, k, k), nf * k * k),
        "b_u1": uni(ks[5], (nf,), nf * k * k),
        "a_u1": jnp.float32(0.30),
        "w_uc1": uni(ks[6], (nf, nf, k, k), nf * k * k),
        "b_uc1": uni(ks[7], (nf,), nf * k * k),
        "a_uc1": jnp.float32(0.10),
        "w_uc2": uni(ks[8], (nf, nf, k, k), nf * k * k),
        "b_uc2": uni(ks[9], (nf,), nf * k * k),
        "a_uc2": jnp.float32(0.15),
        "w_uc3": uni(ks[10], (nf, nf, k, k), nf * k * k),
        "b_uc3": uni(ks[11], (nf,), nf * k * k),
        "a_uc3": jnp.float32(0.05),
    }


if __name__ == "__main__":
    B, in_filter, num_filter, H, W = 2, 4, 8, 16, 16

    key = jax.random.PRNGKey(0)
    kx, kp = jax.random.split(key)
    x = jax.random.normal(kx, (B, in_filter, H, W), jnp.float32)
    params = init_params(kp, in_filter, num_filter)

    # Hoisted weight preprocessing: done once, outside the per-forward trace.
    prep = prepare_params(params)

    fwd = jax.jit(lambda v, pp: feedback_block_v2_2(v, pp, use_pallas=True))
    out = jax.block_until_ready(fwd(x, prep))

    assert out.shape == (B, num_filter, H, W), out.shape
    assert bool(jnp.all(jnp.isfinite(out)))

    # Check 1 (tight): identical math with the Pallas GEMM+epilogue replaced by
    # plain jnp on the same bf16 operands and the same bf16 output casts
    # (validates the kernels themselves).
    ref_same = jax.block_until_ready(
        jax.jit(lambda v, pp: feedback_block_v2_2(v, pp, use_pallas=False))(x, prep))
    err1 = float(jnp.max(jnp.abs(out - ref_same)))
    assert bool(jnp.allclose(out, ref_same, rtol=5e-3, atol=5e-3)), err1

    # Check 2 (bf16 GEMMs + bf16 inter-stage storage -> loose): full-precision
    # lax.conv reference of the original PyTorch forward (validates the
    # sub-pixel deconv rewrite, im2col, fused epilogues and residual gates).
    ref_lax = jax.block_until_ready(
        jax.jit(lambda v: feedback_block_v2_2_lax(v, params))(x))
    err2 = float(jnp.max(jnp.abs(out - ref_lax)))
    assert bool(jnp.allclose(out, ref_lax, rtol=3e-2, atol=3e-2)), err2

    print("KERNEL_OK")
</pallas_src>

<mosaic_0001>
module attributes {stable_mosaic.version = 11 : i64} {
  func.func @kernel(%arg0: i32, %arg1: memref<16x256xbf16, #tpu.memory_space<vmem>>, %arg2: memref<256x8xbf16, #tpu.memory_space<vmem>>, %arg3: memref<1x8xf32, #tpu.memory_space<vmem>>, %arg4: memref<1x1xf32, #tpu.memory_space<smem>>, %arg5: memref<8x8xbf16, #tpu.memory_space<vmem>>, %arg6: memref<1x8xf32, #tpu.memory_space<vmem>>, %arg7: memref<1x1xf32, #tpu.memory_space<smem>>, %arg8: memref<16x8xbf16, #tpu.memory_space<vmem>>) attributes {dimension_semantics = [#tpu.dimension_semantics<parallel>], iteration_bounds = array<i64: 2>, scalar_prefetch = 0 : i64, scratch_operands = 0 : i64, tpu.core_type = #tpu.core_type<tc>, window_params = [{transform_indices = @transform_0, window_bounds = array<i64: 16, 256>}, {pipeline_mode = #tpu.pipeline_mode<synchronous>, transform_indices = @transform_1, window_bounds = array<i64: 256, 8>}, {pipeline_mode = #tpu.pipeline_mode<synchronous>, transform_indices = @transform_2, window_bounds = array<i64: 1, 8>}, {transform_indices = @transform_3, window_bounds = array<i64: 1, 1>}, {pipeline_mode = #tpu.pipeline_mode<synchronous>, transform_indices = @transform_4, window_bounds = array<i64: 8, 8>}, {pipeline_mode = #tpu.pipeline_mode<synchronous>, transform_indices = @transform_5, window_bounds = array<i64: 1, 8>}, {transform_indices = @transform_6, window_bounds = array<i64: 1, 1>}, {transform_indices = @transform_7, window_bounds = array<i64: 16, 8>}]} {
    %c0 = arith.constant 0 : index
    %c0_0 = arith.constant 0 : index
    %0 = vector.load %arg1[%c0, %c0_0] : memref<16x256xbf16, #tpu.memory_space<vmem>>, vector<16x256xbf16>
    %c0_1 = arith.constant 0 : index
    %c0_2 = arith.constant 0 : index
    %1 = vector.load %arg2[%c0_1, %c0_2] : memref<256x8xbf16, #tpu.memory_space<vmem>>, vector<256x8xbf16>
    %c0_3 = arith.constant 0 : index
    %c0_4 = arith.constant 0 : index
    %2 = vector.load %arg3[%c0_3, %c0_4] : memref<1x8xf32, #tpu.memory_space<vmem>>, vector<1x8xf32>
    %c0_5 = arith.constant 0 : index
    %c0_6 = arith.constant 0 : index
    %3 = memref.load %arg4[%c0_5, %c0_6] : memref<1x1xf32, #tpu.memory_space<smem>>
    %c0_7 = arith.constant 0 : index
    %c0_8 = arith.constant 0 : index
    %4 = vector.load %arg5[%c0_7, %c0_8] : memref<8x8xbf16, #tpu.memory_space<vmem>>, vector<8x8xbf16>
    %c0_9 = arith.constant 0 : index
    %c0_10 = arith.constant 0 : index
    %5 = vector.load %arg6[%c0_9, %c0_10] : memref<1x8xf32, #tpu.memory_space<vmem>>, vector<1x8xf32>
    %c0_11 = arith.constant 0 : index
    %c0_12 = arith.constant 0 : index
    %6 = memref.load %arg7[%c0_11, %c0_12] : memref<1x1xf32, #tpu.memory_space<smem>>
    %cst = arith.constant dense<0.000000e+00> : vector<16x8xf32>
    %7 = tpu.matmul %0, %1, %cst {dimension_numbers = #tpu.dot_dimension_numbers<[1], [0], [0], [1], [0, 0, 1, 1], [], []>} : vector<16x256xbf16>, vector<256x8xbf16>, vector<16x8xf32> -> vector<16x8xf32>
    %8 = vector.broadcast %2 : vector<1x8xf32> to vector<16x8xf32>
    %9 = arith.addf %7, %8 : vector<16x8xf32>
    %cst_13 = arith.constant 0.000000e+00 : f32
    %10 = vector.broadcast %cst_13 : f32 to vector<16x8xf32>
    %11 = arith.cmpf ogt, %9, %10 : vector<16x8xf32>
    %12 = vector.broadcast %3 : f32 to vector<16x8xf32>
    %13 = arith.mulf %12, %9 : vector<16x8xf32>
    %14 = arith.select %11, %9, %13 : vector<16x8xi1>, vector<16x8xf32>
    %15 = arith.truncf %14 : vector<16x8xf32> to vector<16x8xbf16>
    %cst_14 = arith.constant dense<0.000000e+00> : vector<16x8xf32>
    %16 = tpu.matmul %15, %4, %cst_14 {dimension_numbers = #tpu.dot_dimension_numbers<[1], [0], [0], [1], [0, 0, 1, 1], [], []>} : vector<16x8xbf16>, vector<8x8xbf16>, vector<16x8xf32> -> vector<16x8xf32>
    %17 = vector.broadcast %5 : vector<1x8xf32> to vector<16x8xf32>
    %18 = arith.addf %16, %17 : vector<16x8xf32>
    %cst_15 = arith.constant 0.000000e+00 : f32
    %19 = vector.broadcast %cst_15 : f32 to vector<16x8xf32>
    %20 = arith.cmpf ogt, %18, %19 : vector<16x8xf32>
    %21 = vector.broadcast %6 : f32 to vector<16x8xf32>
    %22 = arith.mulf %21, %18 : vector<16x8xf32>
    %23 = arith.select %20, %18, %22 : vector<16x8xi1>, vector<16x8xf32>
    %24 = arith.truncf %23 : vector<16x8xf32> to vector<16x8xbf16>
    %c0_16 = arith.constant 0 : index
    %c0_17 = arith.constant 0 : index
    %25 = vector.load %arg8[%c0_16, %c0_17] : memref<16x8xbf16, #tpu.memory_space<vmem>>, vector<16x8xbf16>
    tpu.vector_store %arg8[%c0_16, %c0_17], %24 {strides = array<i32>} : memref<16x8xbf16, #tpu.memory_space<vmem>>, vector<16x8xbf16>,
    return
  }
  func.func @transform_0(%arg0: i32) -> (i32, i32) {
    %c0_i32 = arith.constant 0 : i32
    %c0_i32_0 = arith.constant 0 : i32
    return %arg0, %c0_i32 : i32, i32
  }
  func.func @transform_1(%arg0: i32) -> (i32, i32) {
    %c0_i32 = arith.constant 0 : i32
    %c0_i32_0 = arith.constant 0 : i32
    %c0_i32_1 = arith.constant 0 : i32
    return %c0_i32, %c0_i32_0 : i32, i32
  }
  func.func @transform_2(%arg0: i32) -> (i32, i32) {
    %c0_i32 = arith.constant 0 : i32
    %c0_i32_0 = arith.constant 0 : i32
    %c0_i32_1 = arith.constant 0 : i32
    return %c0_i32, %c0_i32_0 : i32, i32
  }
  func.func @transform_3(%arg0: i32) -> (i32, i32) {
    %c0_i32 = arith.constant 0 : i32
    %c0_i32_0 = arith.constant 0 : i32
    %c0_i32_1 = arith.constant 0 : i32
    return %c0_i32, %c0_i32_0 : i32, i32
  }
  func.func @transform_4(%arg0: i32) -> (i32, i32) {
    %c0_i32 = arith.constant 0 : i32
    %c0_i32_0 = arith.constant 0 : i32
    %c0_i32_1 = arith.constant 0 : i32
    return %c0_i32, %c0_i32_0 : i32, i32
  }
  func.func @transform_5(%arg0: i32) -> (i32, i32) {
    %c0_i32 = arith.constant 0 : i32
    %c0_i32_0 = arith.constant 0 : i32
    %c0_i32_1 = arith.constant 0 : i32
    return %c0_i32, %c0_i32_0 : i32, i32
  }
  func.func @transform_6(%arg0: i32) -> (i32, i32) {
    %c0_i32 = arith.constant 0 : i32
    %c0_i32_0 = arith.constant 0 : i32
    %c0_i32_1 = arith.constant 0 : i32
    return %c0_i32, %c0_i32_0 : i32, i32
  }
  func.func @transform_7(%arg0: i32) -> (i32, i32) {
    %c0_i32 = arith.constant 0 : i32
    %c0_i32_0 = arith.constant 0 : i32
    return %arg0, %c0_i32 : i32, i32
  }
}

module attributes {stable_mosaic.version = 11 : i64} {
  func.func @kernel(%arg0: i32, %arg1: memref<8x128xbf16, #tpu.memory_space<vmem>>, %arg2: memref<128x128xbf16, #tpu.memory_space<vmem>>, %arg3: memref<1x128xf32, #tpu.memory_space<vmem>>, %arg4: memref<1x1xf32, #tpu.memory_space<smem>>, %arg5: memref<8x128xbf16, #tpu.memory_space<vmem>>, %arg6: memref<8x128xbf16, #tpu.memory_space<vmem>>) attributes {dimension_semantics = [#tpu.dimension_semantics<parallel>], iteration_bounds = array<i64: 1>, scalar_prefetch = 0 : i64, scratch_operands = 0 : i64, tpu.core_type = #tpu.core_type<tc>, window_params = [{transform_indices = @transform_0, window_bounds = array<i64: 8, 128>}, {pipeline_mode = #tpu.pipeline_mode<synchronous>, transform_indices = @transform_1, window_bounds = array<i64: 128, 128>}, {pipeline_mode = #tpu.pipeline_mode<synchronous>, transform_indices = @transform_2, window_bounds = array<i64: 1, 128>}, {transform_indices = @transform_3, window_bounds = array<i64: 1, 1>}, {transform_indices = @transform_4, window_bounds = array<i64: 8, 128>}, {transform_indices = @transform_5, window_bounds = array<i64: 8, 128>}]} {
    %c0 = arith.constant 0 : index
    %c0_0 = arith.constant 0 : index
    %0 = vector.load %arg1[%c0, %c0_0] : memref<8x128xbf16, #tpu.memory_space<vmem>>, vector<8x128xbf16>
    %c0_1 = arith.constant 0 : index
    %c0_2 = arith.constant 0 : index
    %1 = vector.load %arg2[%c0_1, %c0_2] : memref<128x128xbf16, #tpu.memory_space<vmem>>, vector<128x128xbf16>
    %c0_3 = arith.constant 0 : index
    %c0_4 = arith.constant 0 : index
    %2 = vector.load %arg3[%c0_3, %c0_4] : memref<1x128xf32, #tpu.memory_space<vmem>>, vector<1x128xf32>
    %c0_5 = arith.constant 0 : index
    %c0_6 = arith.constant 0 : index
    %3 = memref.load %arg4[%c0_5, %c0_6] : memref<1x1xf32, #tpu.memory_space<smem>>
    %c0_7 = arith.constant 0 : index
    %c0_8 = arith.constant 0 : index
    %4 = vector.load %arg5[%c0_7, %c0_8] : memref<8x128xbf16, #tpu.memory_space<vmem>>, vector<8x128xbf16>
    %cst = arith.constant dense<0.000000e+00> : vector<8x128xf32>
    %5 = tpu.matmul %0, %1, %cst {dimension_numbers = #tpu.dot_dimension_numbers<[1], [0], [0], [1], [0, 0, 1, 1], [], []>} : vector<8x128xbf16>, vector<128x128xbf16>, vector<8x128xf32> -> vector<8x128xf32>
    %6 = vector.broadcast %2 : vector<1x128xf32> to vector<8x128xf32>
    %7 = arith.addf %5, %6 : vector<8x128xf32>
    %cst_9 = arith.constant 0.000000e+00 : f32
    %8 = vector.broadcast %cst_9 : f32 to vector<8x128xf32>
    %9 = arith.cmpf ogt, %7, %8 : vector<8x128xf32>
    %10 = vector.broadcast %3 : f32 to vector<8x128xf32>
    %11 = arith.mulf %10, %7 : vector<8x128xf32>
    %12 = arith.select %9, %7, %11 : vector<8x128xi1>, vector<8x128xf32>
    %13 = arith.extf %4 : vector<8x128xbf16> to vector<8x128xf32>
    %14 = arith.subf %13, %12 : vector<8x128xf32>
    %cst_10 = arith.constant 0.000000e+00 : f32
    %15 = vector.broadcast %cst_10 : f32 to vector<8x128xf32>
    %16 = arith.maximumf %14, %15 : vector<8x128xf32>
    %cst_11 = arith.constant 1.000000e-01 : f32
    %17 = vector.broadcast %cst_11 : f32 to vector<8x128xf32>
    %18 = arith.mulf %17, %16 : vector<8x128xf32>
    %19 = arith.mulf %18, %13 : vector<8x128xf32>
    %20 = arith.addf %13, %19 : vector<8x128xf32>
    %21 = arith.truncf %20 : vector<8x128xf32> to vector<8x128xbf16>
    %c0_12 = arith.constant 0 : index
    %c0_13 = arith.constant 0 : index
    %22 = vector.load %arg6[%c0_12, %c0_13] : memref<8x128xbf16, #tpu.memory_space<vmem>>, vector<8x128xbf16>
    tpu.vector_store %arg6[%c0_12, %c0_13], %21 {strides = array<i32>} : memref<8x128xbf16, #tpu.memory_space<vmem>>, vector<8x128xbf16>,
    return
  }
  func.func @transform_0(%arg0: i32) -> (i32, i32) {
    %c0_i32 = arith.constant 0 : i32
    %c0_i32_0 = arith.constant 0 : i32
    return %arg0, %c0_i32 : i32, i32
  }
  func.func @transform_1(%arg0: i32) -> (i32, i32) {
    %c0_i32 = arith.constant 0 : i32
    %c0_i32_0 = arith.constant 0 : i32
    %c0_i32_1 = arith.constant 0 : i32
    return %c0_i32, %c0_i32_0 : i32, i32
  }
  func.func @transform_2(%arg0: i32) -> (i32, i32) {
    %c0_i32 = arith.constant 0 : i32
    %c0_i32_0 = arith.constant 0 : i32
    %c0_i32_1 = arith.constant 0 : i32
    return %c0_i32, %c0_i32_0 : i32, i32
  }
  func.func @transform_3(%arg0: i32) -> (i32, i32) {
    %c0_i32 = arith.constant 0 : i32
    %c0_i32_0 = arith.constant 0 : i32
    %c0_i32_1 = arith.constant 0 : i32
    return %c0_i32, %c0_i32_0 : i32, i32
  }
  func.func @transform_4(%arg0: i32) -> (i32, i32) {
    %c0_i32 = arith.constant 0 : i32
    %c0_i32_0 = arith.constant 0 : i32
    return %arg0, %c0_i32 : i32, i32
  }
  func.func @transform_5(%arg0: i32) -> (i32, i32) {
    %c0_i32 = arith.constant 0 : i32
    %c0_i32_0 = arith.constant 0 : i32
    return %arg0, %c0_i32 : i32, i32
  }
}

module attributes {stable_mosaic.version = 11 : i64} {
  func.func @kernel(%arg0: i32, %arg1: memref<16x128xbf16, #tpu.memory_space<vmem>>, %arg2: memref<128x128xbf16, #tpu.memory_space<vmem>>, %arg3: memref<1x128xf32, #tpu.memory_space<vmem>>, %arg4: memref<1x1xf32, #tpu.memory_space<smem>>, %arg5: memref<16x128xbf16, #tpu.memory_space<vmem>>) attributes {dimension_semantics = [#tpu.dimension_semantics<parallel>], iteration_bounds = array<i64: 2>, scalar_prefetch = 0 : i64, scratch_operands = 0 : i64, tpu.core_type = #tpu.core_type<tc>, window_params = [{transform_indices = @transform_0, window_bounds = array<i64: 16, 128>}, {pipeline_mode = #tpu.pipeline_mode<synchronous>, transform_indices = @transform_1, window_bounds = array<i64: 128, 128>}, {pipeline_mode = #tpu.pipeline_mode<synchronous>, transform_indices = @transform_2, window_bounds = array<i64: 1, 128>}, {transform_indices = @transform_3, window_bounds = array<i64: 1, 1>}, {transform_indices = @transform_4, window_bounds = array<i64: 16, 128>}]} {
    %c0 = arith.constant 0 : index
    %c0_0 = arith.constant 0 : index
    %0 = vector.load %arg1[%c0, %c0_0] : memref<16x128xbf16, #tpu.memory_space<vmem>>, vector<16x128xbf16>
    %c0_1 = arith.constant 0 : index
    %c0_2 = arith.constant 0 : index
    %1 = vector.load %arg2[%c0_1, %c0_2] : memref<128x128xbf16, #tpu.memory_space<vmem>>, vector<128x128xbf16>
    %c0_3 = arith.constant 0 : index
    %c0_4 = arith.constant 0 : index
    %2 = vector.load %arg3[%c0_3, %c0_4] : memref<1x128xf32, #tpu.memory_space<vmem>>, vector<1x128xf32>
    %c0_5 = arith.constant 0 : index
    %c0_6 = arith.constant 0 : index
    %3 = memref.load %arg4[%c0_5, %c0_6] : memref<1x1xf32, #tpu.memory_space<smem>>
    %cst = arith.constant dense<0.000000e+00> : vector<16x128xf32>
    %4 = tpu.matmul %0, %1, %cst {dimension_numbers = #tpu.dot_dimension_numbers<[1], [0], [0], [1], [0, 0, 1, 1], [], []>} : vector<16x128xbf16>, vector<128x128xbf16>, vector<16x128xf32> -> vector<16x128xf32>
    %5 = vector.broadcast %2 : vector<1x128xf32> to vector<16x128xf32>
    %6 = arith.addf %4, %5 : vector<16x128xf32>
    %cst_7 = arith.constant 0.000000e+00 : f32
    %7 = vector.broadcast %cst_7 : f32 to vector<16x128xf32>
    %8 = arith.cmpf ogt, %6, %7 : vector<16x128xf32>
    %9 = vector.broadcast %3 : f32 to vector<16x128xf32>
    %10 = arith.mulf %9, %6 : vector<16x128xf32>
    %11 = arith.select %8, %6, %10 : vector<16x128xi1>, vector<16x128xf32>
    %12 = arith.truncf %11 : vector<16x128xf32> to vector<16x128xbf16>
    %c0_8 = arith.constant 0 : index
    %c0_9 = arith.constant 0 : index
    %13 = vector.load %arg5[%c0_8, %c0_9] : memref<16x128xbf16, #tpu.memory_space<vmem>>, vector<16x128xbf16>
    tpu.vector_store %arg5[%c0_8, %c0_9], %12 {strides = array<i32>} : memref<16x128xbf16, #tpu.memory_space<vmem>>, vector<16x128xbf16>,
    return
  }
  func.func @transform_0(%arg0: i32) -> (i32, i32) {
    %c0_i32 = arith.constant 0 : i32
    %c0_i32_0 = arith.constant 0 : i32
    return %arg0, %c0_i32 : i32, i32
  }
  func.func @transform_1(%arg0: i32) -> (i32, i32) {
    %c0_i32 = arith.constant 0 : i32
    %c0_i32_0 = arith.constant 0 : i32
    %c0_i32_1 = arith.constant 0 : i32
    return %c0_i32, %c0_i32_0 : i32, i32
  }
  func.func @transform_2(%arg0: i32) -> (i32, i32) {
    %c0_i32 = arith.constant 0 : i32
    %c0_i32_0 = arith.constant 0 : i32
    %c0_i32_1 = arith.constant 0 : i32
    return %c0_i32, %c0_i32_0 : i32, i32
  }
  func.func @transform_3(%arg0: i32) -> (i32, i32) {
    %c0_i32 = arith.constant 0 : i32
    %c0_i32_0 = arith.constant 0 : i32
    %c0_i32_1 = arith.constant 0 : i32
    return %c0_i32, %c0_i32_0 : i32, i32
  }
  func.func @transform_4(%arg0: i32) -> (i32, i32) {
    %c0_i32 = arith.constant 0 : i32
    %c0_i32_0 = arith.constant 0 : i32
    return %arg0, %c0_i32 : i32, i32
  }
}

module attributes {stable_mosaic.version = 11 : i64} {
  func.func @kernel(%arg0: i32, %arg1: memref<16x512xbf16, #tpu.memory_space<vmem>>, %arg2: memref<512x8xbf16, #tpu.memory_space<vmem>>, %arg3: memref<1x8xf32, #tpu.memory_space<vmem>>, %arg4: memref<1x1xf32, #tpu.memory_space<smem>>, %arg5: memref<16x8xbf16, #tpu.memory_space<vmem>>, %arg6: memref<16x8xbf16, #tpu.memory_space<vmem>>) attributes {dimension_semantics = [#tpu.dimension_semantics<parallel>], iteration_bounds = array<i64: 2>, scalar_prefetch = 0 : i64, scratch_operands = 0 : i64, tpu.core_type = #tpu.core_type<tc>, window_params = [{transform_indices = @transform_0, window_bounds = array<i64: 16, 512>}, {pipeline_mode = #tpu.pipeline_mode<synchronous>, transform_indices = @transform_1, window_bounds = array<i64: 512, 8>}, {pipeline_mode = #tpu.pipeline_mode<synchronous>, transform_indices = @transform_2, window_bounds = array<i64: 1, 8>}, {transform_indices = @transform_3, window_bounds = array<i64: 1, 1>}, {transform_indices = @transform_4, window_bounds = array<i64: 16, 8>}, {transform_indices = @transform_5, window_bounds = array<i64: 16, 8>}]} {
    %c0 = arith.constant 0 : index
    %c0_0 = arith.constant 0 : index
    %0 = vector.load %arg1[%c0, %c0_0] : memref<16x512xbf16, #tpu.memory_space<vmem>>, vector<16x512xbf16>
    %c0_1 = arith.constant 0 : index
    %c0_2 = arith.constant 0 : index
    %1 = vector.load %arg2[%c0_1, %c0_2] : memref<512x8xbf16, #tpu.memory_space<vmem>>, vector<512x8xbf16>
    %c0_3 = arith.constant 0 : index
    %c0_4 = arith.constant 0 : index
    %2 = vector.load %arg3[%c0_3, %c0_4] : memref<1x8xf32, #tpu.memory_space<vmem>>, vector<1x8xf32>
    %c0_5 = arith.constant 0 : index
    %c0_6 = arith.constant 0 : index
    %3 = memref.load %arg4[%c0_5, %c0_6] : memref<1x1xf32, #tpu.memory_space<smem>>
    %c0_7 = arith.constant 0 : index
    %c0_8 = arith.constant 0 : index
    %4 = vector.load %arg5[%c0_7, %c0_8] : memref<16x8xbf16, #tpu.memory_space<vmem>>, vector<16x8xbf16>
    %cst = arith.constant dense<0.000000e+00> : vector<16x8xf32>
    %5 = tpu.matmul %0, %1, %cst {dimension_numbers = #tpu.dot_dimension_numbers<[1], [0], [0], [1], [0, 0, 1, 1], [], []>} : vector<16x512xbf16>, vector<512x8xbf16>, vector<16x8xf32> -> vector<16x8xf32>
    %6 = vector.broadcast %2 : vector<1x8xf32> to vector<16x8xf32>
    %7 = arith.addf %5, %6 : vector<16x8xf32>
    %cst_9 = arith.constant 0.000000e+00 : f32
    %8 = vector.broadcast %cst_9 : f32 to vector<16x8xf32>
    %9 = arith.cmpf ogt, %7, %8 : vector<16x8xf32>
    %10 = vector.broadcast %3 : f32 to vector<16x8xf32>
    %11 = arith.mulf %10, %7 : vector<16x8xf32>
    %12 = arith.select %9, %7, %11 : vector<16x8xi1>, vector<16x8xf32>
    %13 = arith.extf %4 : vector<16x8xbf16> to vector<16x8xf32>
    %14 = arith.subf %12, %13 : vector<16x8xf32>
    %15 = arith.truncf %14 : vector<16x8xf32> to vector<16x8xbf16>
    %c0_10 = arith.constant 0 : index
    %c0_11 = arith.constant 0 : index
    %16 = vector.load %arg6[%c0_10, %c0_11] : memref<16x8xbf16, #tpu.memory_space<vmem>>, vector<16x8xbf16>
    tpu.vector_store %arg6[%c0_10, %c0_11], %15 {strides = array<i32>} : memref<16x8xbf16, #tpu.memory_space<vmem>>, vector<16x8xbf16>,
    return
  }
  func.func @transform_0(%arg0: i32) -> (i32, i32) {
    %c0_i32 = arith.constant 0 : i32
    %c0_i32_0 = arith.constant 0 : i32
    return %arg0, %c0_i32 : i32, i32
  }
  func.func @transform_1(%arg0: i32) -> (i32, i32) {
    %c0_i32 = arith.constant 0 : i32
    %c0_i32_0 = arith.constant 0 : i32
    %c0_i32_1 = arith.constant 0 : i32
    return %c0_i32, %c0_i32_0 : i32, i32
  }
  func.func @transform_2(%arg0: i32) -> (i32, i32) {
    %c0_i32 = arith.constant 0 : i32
    %c0_i32_0 = arith.constant 0 : i32
    %c0_i32_1 = arith.constant 0 : i32
    return %c0_i32, %c0_i32_0 : i32, i32
  }
  func.func @transform_3(%arg0: i32) -> (i32, i32) {
    %c0_i32 = arith.constant 0 : i32
    %c0_i32_0 = arith.constant 0 : i32
    %c0_i32_1 = arith.constant 0 : i32
    return %c0_i32, %c0_i32_0 : i32, i32
  }
  func.func @transform_4(%arg0: i32) -> (i32, i32) {
    %c0_i32 = arith.constant 0 : i32
    %c0_i32_0 = arith.constant 0 : i32
    return %arg0, %c0_i32 : i32, i32
  }
  func.func @transform_5(%arg0: i32) -> (i32, i32) {
    %c0_i32 = arith.constant 0 : i32
    %c0_i32_0 = arith.constant 0 : i32
    return %arg0, %c0_i32 : i32, i32
  }
}

module attributes {stable_mosaic.version = 11 : i64} {
  func.func @kernel(%arg0: i32, %arg1: memref<16x128xbf16, #tpu.memory_space<vmem>>, %arg2: memref<128x128xbf16, #tpu.memory_space<vmem>>, %arg3: memref<1x128xf32, #tpu.memory_space<vmem>>, %arg4: memref<1x1xf32, #tpu.memory_space<smem>>, %arg5: memref<16x128xbf16, #tpu.memory_space<vmem>>, %arg6: memref<16x128xf32, #tpu.memory_space<vmem>>) attributes {dimension_semantics = [#tpu.dimension_semantics<parallel>], iteration_bounds = array<i64: 2>, scalar_prefetch = 0 : i64, scratch_operands = 0 : i64, tpu.core_type = #tpu.core_type<tc>, window_params = [{transform_indices = @transform_0, window_bounds = array<i64: 16, 128>}, {pipeline_mode = #tpu.pipeline_mode<synchronous>, transform_indices = @transform_1, window_bounds = array<i64: 128, 128>}, {pipeline_mode = #tpu.pipeline_mode<synchronous>, transform_indices = @transform_2, window_bounds = array<i64: 1, 128>}, {transform_indices = @transform_3, window_bounds = array<i64: 1, 1>}, {transform_indices = @transform_4, window_bounds = array<i64: 16, 128>}, {transform_indices = @transform_5, window_bounds = array<i64: 16, 128>}]} {
    %c0 = arith.constant 0 : index
    %c0_0 = arith.constant 0 : index
    %0 = vector.load %arg1[%c0, %c0_0] : memref<16x128xbf16, #tpu.memory_space<vmem>>, vector<16x128xbf16>
    %c0_1 = arith.constant 0 : index
    %c0_2 = arith.constant 0 : index
    %1 = vector.load %arg2[%c0_1, %c0_2] : memref<128x128xbf16, #tpu.memory_space<vmem>>, vector<128x128xbf16>
    %c0_3 = arith.constant 0 : index
    %c0_4 = arith.constant 0 : index
    %2 = vector.load %arg3[%c0_3, %c0_4] : memref<1x128xf32, #tpu.memory_space<vmem>>, vector<1x128xf32>
    %c0_5 = arith.constant 0 : index
    %c0_6 = arith.constant 0 : index
    %3 = memref.load %arg4[%c0_5, %c0_6] : memref<1x1xf32, #tpu.memory_space<smem>>
    %c0_7 = arith.constant 0 : index
    %c0_8 = arith.constant 0 : index
    %4 = vector.load %arg5[%c0_7, %c0_8] : memref<16x128xbf16, #tpu.memory_space<vmem>>, vector<16x128xbf16>
    %cst = arith.constant dense<0.000000e+00> : vector<16x128xf32>
    %5 = tpu.matmul %0, %1, %cst {dimension_numbers = #tpu.dot_dimension_numbers<[1], [0], [0], [1], [0, 0, 1, 1], [], []>} : vector<16x128xbf16>, vector<128x128xbf16>, vector<16x128xf32> -> vector<16x128xf32>
    %6 = vector.broadcast %2 : vector<1x128xf32> to vector<16x128xf32>
    %7 = arith.addf %5, %6 : vector<16x128xf32>
    %cst_9 = arith.constant 0.000000e+00 : f32
    %8 = vector.broadcast %cst_9 : f32 to vector<16x128xf32>
    %9 = arith.cmpf ogt, %7, %8 : vector<16x128xf32>
    %10 = vector.broadcast %3 : f32 to vector<16x128xf32>
    %11 = arith.mulf %10, %7 : vector<16x128xf32>
    %12 = arith.select %9, %7, %11 : vector<16x128xi1>, vector<16x128xf32>
    %13 = arith.extf %4 : vector<16x128xbf16> to vector<16x128xf32>
    %cst_10 = arith.constant 0.000000e+00 : f32
    %14 = vector.broadcast %cst_10 : f32 to vector<16x128xf32>
    %15 = arith.maximumf %12, %14 : vector<16x128xf32>
    %cst_11 = arith.constant 2.000000e-01 : f32
    %16 = vector.broadcast %cst_11 : f32 to vector<16x128xf32>
    %17 = arith.mulf %16, %15 : vector<16x128xf32>
    %18 = arith.mulf %17, %13 : vector<16x128xf32>
    %19 = arith.addf %13, %18 : vector<16x128xf32>
    %c0_12 = arith.constant 0 : index
    %c0_13 = arith.constant 0 : index
    %20 = vector.load %arg6[%c0_12, %c0_13] : memref<16x128xf32, #tpu.memory_space<vmem>>, vector<16x128xf32>
    tpu.vector_store %arg6[%c0_12, %c0_13], %19 {strides = array<i32>} : memref<16x128xf32, #tpu.memory_space<vmem>>, vector<16x128xf32>,
    return
  }
  func.func @transform_0(%arg0: i32) -> (i32, i32) {
    %c0_i32 = arith.constant 0 : i32
    %c0_i32_0 = arith.constant 0 : i32
    return %arg0, %c0_i32 : i32, i32
  }
  func.func @transform_1(%arg0: i32) -> (i32, i32) {
    %c0_i32 = arith.constant 0 : i32
    %c0_i32_0 = arith.constant 0 : i32
    %c0_i32_1 = arith.constant 0 : i32
    return %c0_i32, %c0_i32_0 : i32, i32
  }
  func.func @transform_2(%arg0: i32) -> (i32, i32) {
    %c0_i32 = arith.constant 0 : i32
    %c0_i32_0 = arith.constant 0 : i32
    %c0_i32_1 = arith.constant 0 : i32
    return %c0_i32, %c0_i32_0 : i32, i32
  }
  func.func @transform_3(%arg0: i32) -> (i32, i32) {
    %c0_i32 = arith.constant 0 : i32
    %c0_i32_0 = arith.constant 0 : i32
    %c0_i32_1 = arith.constant 0 : i32
    return %c0_i32, %c0_i32_0 : i32, i32
  }
  func.func @transform_4(%arg0: i32) -> (i32, i32) {
    %c0_i32 = arith.constant 0 : i32
    %c0_i32_0 = arith.constant 0 : i32
    return %arg0, %c0_i32 : i32, i32
  }
  func.func @transform_5(%arg0: i32) -> (i32, i32) {
    %c0_i32 = arith.constant 0 : i32
    %c0_i32_0 = arith.constant 0 : i32
    return %arg0, %c0_i32 : i32, i32
  }
}

</mosaic_0001>

<llo_original>
// kernel: _lambda_.5
$region0: #{_lambda_.5}
  #allocation0 [shape = 'u32[]', space=smem, size = 0x4, offset = 0x4, fixed_abs, tag = 'smem constant byte address 0x4 - core index']
  #allocation1 [shape = 'u32[72,128]{1,0:T(1,128)}', space=vmem, size = 0x9000, scoped, tag = 'internal scratch']
  #allocation2 [shape = 'f32[1,1]{1,0:T(1,128)S(6)}', space=smem, size = 0x200, scoped, tag = 'scoped memory for _lambda_.5']
  #allocation3 [shape = 'f32[1,1]{1,0:T(1,128)S(6)}', space=smem, size = 0x200, scoped, tag = 'scoped memory for _lambda_.5']
  %s0 = inlined_call_operand.vmem [shape: bf16[32,256], index: 0, kind: input, shape index: {}]
  %s1 = inlined_call_operand.vmem [shape: bf16[256,8], index: 1, kind: input, shape index: {}]
  %s2 = inlined_call_operand.vmem [shape: f32[1,8], index: 2, kind: input, shape index: {}]
  %s3 = inlined_call_operand.<no memory space> [shape: f32[1,1], index: 3, kind: input, shape index: {}]
  %s4 = inlined_call_operand.vmem [shape: bf16[8,8], index: 4, kind: input, shape index: {}]
  %s5 = inlined_call_operand.vmem [shape: f32[1,8], index: 5, kind: input, shape index: {}]
  %s6 = inlined_call_operand.<no memory space> [shape: f32[1,1], index: 6, kind: input, shape index: {}]
  %s7 = inlined_call_operand.vmem [shape: bf16[32,8], index: 7, kind: output, shape index: {}]
  %s8 = sld [smem:[#allocation0]]
  $region61: #{_lambda_.5} parent=0
    _
  %s10 = ssub.s32 1, %s8
  %s11 = scalar_select 0, %s10, %s8
  %12 = sst [smem:[#allocation2]] %s3
  %13 = sst [smem:[#allocation3]] %s6
  loop: start=0, step=1, limit=4
  $region2: #{_lambda_.5} parent=0 // loop_pre_header
    _
  $region3: #{_lambda_.5} parent=0 // loop_header
    %s15 = sphi 0, %s19
    %p16 = scmp.ge.s32.totalorder %s15, 4
    %s25 = sphi 0, %s27
    %s28 = sphi 0, %s25
    %s29 = sphi 0, %s28
    %s45 = sphi 0, %s29
    %s49 = sphi 0, %s49
    %s51 = sphi 0, %s49
    %s52 = sphi 0, %s51
    %s66 = sphi 0, %s52
    %s70 = sphi 0, %s70
    %s72 = sphi 0, %s70
    %s73 = sphi 0, %s72
    %s87 = sphi 0, %s73
    %s91 = sphi 0, %s91
    %s93 = sphi 0, %s91
    %s94 = sphi 0, %s93
    %s108 = sphi 0, %s94
    %s112 = sphi 0, %s112
    %s114 = sphi 0, %s112
    %s115 = sphi 0, %s114
    %s129 = sphi 0, %s115
    %s133 = sphi 0, %s133
    %s135 = sphi 0, %s133
    %s136 = sphi 0, %s135
    %s150 = sphi 0, %s136
    %s154 = sphi 0, %s154
    %s156 = sphi 0, %s154
    %s157 = sphi 0, %s156
    %s171 = sphi 0, %s157
    %s177 = sphi 0, %s179
    %s180 = sphi 0, %s177
    %s181 = sphi 0, %s180
    %s197 = sphi 0, %s181
  $region4: #{_lambda_.5} parent=0 // loop_header_branch
    %18 = sbr.rel (%p16) target = $region8
  $region5: #{_lambda_.5} parent=0 // loop_body
    %s20 = ssub.s32 %s15, 1
    %s21 = ssub.s32 %s15, 2
    %s22 = sadd.s32 %s15, 1
    %s23 = ssub.s32 %s15, %s22
    %p24 = scmp.eq.s32.totalorder %s23, 0
    %s26 = sadd.s32 %s25, 1
    %s27 = scalar_select %p24, %s25, %s26
    %p30 = pneg %p24
    %p31 = scmp.eq.s32.totalorder %s15, 1
    %p32 = por %p30, %p31
    %p33 = scmp.ne.s32.totalorder %s25, %s28
    %p34 = scmp.eq.s32.totalorder %s15, 0
    %p35 = por %p33, %p34
    %p36 = scmp.ne.s32.totalorder %s25, %s28
    %p37 = scmp.eq.s32.totalorder %s20, 1
    %p38 = por %p36, %p37
    %p39 = scmp.ne.s32.totalorder %s28, %s29
    %p40 = scmp.eq.s32.totalorder %s20, 0
    %p41 = por %p39, %p40
    %p42 = scmp.ne.s32.totalorder %s28, %s29
    %p43 = scmp.eq.s32.totalorder %s21, 1
    %p44 = por %p42, %p43
    %p46 = scmp.ne.s32.totalorder %s29, %s45
    %p47 = scmp.eq.s32.totalorder %s21, 0
    %p48 = por %p46, %p47
    %s50 = sadd.s32 %s49, 1
    %p53 = scmp.eq.s32.totalorder %s15, 1
    %p54 = scmp.ne.s32.totalorder %s49, %s51
    %p55 = scmp.eq.s32.totalorder %s15, 0
    %p56 = por %p54, %p55
    %p57 = scmp.ne.s32.totalorder %s49, %s51
    %p58 = scmp.eq.s32.totalorder %s20, 1
    %p59 = por %p57, %p58
    %p60 = scmp.ne.s32.totalorder %s51, %s52
    %p61 = scmp.eq.s32.totalorder %s20, 0
    %p62 = por %p60, %p61
    %p63 = scmp.ne.s32.totalorder %s51, %s52
    %p64 = scmp.eq.s32.totalorder %s21, 1
    %p65 = por %p63, %p64
    %p67 = scmp.ne.s32.totalorder %s52, %s66
    %p68 = scmp.eq.s32.totalorder %s21, 0
    %p69 = por %p67, %p68
    %s71 = sadd.s32 %s70, 1
    %p74 = scmp.eq.s32.totalorder %s15, 1
    %p75 = scmp.ne.s32.totalorder %s70, %s72
    %p76 = scmp.eq.s32.totalorder %s15, 0
    %p77 = por %p75, %p76
    %p78 = scmp.ne.s32.totalorder %s70, %s72
    %p79 = scmp.eq.s32.totalorder %s20, 1
    %p80 = por %p78, %p79
    %p81 = scmp.ne.s32.totalorder %s72, %s73
    %p82 = scmp.eq.s32.totalorder %s20, 0
    %p83 = por %p81, %p82
    %p84 = scmp.ne.s32.totalorder %s72, %s73
    %p85 = scmp.eq.s32.totalorder %s21, 1
    %p86 = por %p84, %p85
    %p88 = scmp.ne.s32.totalorder %s73, %s87
    %p89 = scmp.eq.s32.totalorder %s21, 0
    %p90 = por %p88, %p89
    %s92 = sadd.s32 %s91, 1
    %p95 = scmp.eq.s32.totalorder %s15, 1
    %p96 = scmp.ne.s32.totalorder %s91, %s93
    %p97 = scmp.eq.s32.totalorder %s15, 0
    %p98 = por %p96, %p97
    %p99 = scmp.ne.s32.totalorder %s91, %s93
    %p100 = scmp.eq.s32.totalorder %s20, 1
    %p101 = por %p99, %p100
    %p102 = scmp.ne.s32.totalorder %s93, %s94
    %p103 = scmp.eq.s32.totalorder %s20, 0
    %p104 = por %p102, %p103
    %p105 = scmp.ne.s32.totalorder %s93, %s94
    %p106 = scmp.eq.s32.totalorder %s21, 1
    %p107 = por %p105, %p106
    %p109 = scmp.ne.s32.totalorder %s94, %s108
    %p110 = scmp.eq.s32.totalorder %s21, 0
    %p111 = por %p109, %p110
    %s113 = sadd.s32 %s112, 1
    %p116 = scmp.eq.s32.totalorder %s15, 1
    %p117 = scmp.ne.s32.totalorder %s112, %s114
    %p118 = scmp.eq.s32.totalorder %s15, 0
    %p119 = por %p117, %p118
    %p120 = scmp.ne.s32.totalorder %s112, %s114
    %p121 = scmp.eq.s32.totalorder %s20, 1
    %p122 = por %p120, %p121
    %p123 = scmp.ne.s32.totalorder %s114, %s115
    %p124 = scmp.eq.s32.totalorder %s20, 0
    %p125 = por %p123, %p124
    %p126 = scmp.ne.s32.totalorder %s114, %s115
    %p127 = scmp.eq.s32.totalorder %s21, 1
    %p128 = por %p126, %p127
    %p130 = scmp.ne.s32.totalorder %s115, %s129
    %p131 = scmp.eq.s32.totalorder %s21, 0
    %p132 = por %p130, %p131
    %s134 = sadd.s32 %s133, 1
    %p137 = scmp.eq.s32.totalorder %s15, 1
    %p138 = scmp.ne.s32.totalorder %s133, %s135
    %p139 = scmp.eq.s32.totalorder %s15, 0
    %p140 = por %p138, %p139
    %p141 = scmp.ne.s32.totalorder %s133, %s135
    %p142 = scmp.eq.s32.totalorder %s20, 1
    %p143 = por %p141, %p142
    %p144 = scmp.ne.s32.totalorder %s135, %s136
    %p145 = scmp.eq.s32.totalorder %s20, 0
    %p146 = por %p144, %p145
    %p147 = scmp.ne.s32.totalorder %s135, %s136
    %p148 = scmp.eq.s32.totalorder %s21, 1
    %p149 = por %p147, %p148
    %p151 = scmp.ne.s32.totalorder %s136, %s150
    %p152 = scmp.eq.s32.totalorder %s21, 0
    %p153 = por %p151, %p152
    %s155 = sadd.s32 %s154, 1
    %p158 = scmp.eq.s32.totalorder %s15, 1
    %p159 = scmp.ne.s32.totalorder %s154, %s156
    %p160 = scmp.eq.s32.totalorder %s15, 0
    %p161 = por %p159, %p160
    %p162 = scmp.ne.s32.totalorder %s154, %s156
    %p163 = scmp.eq.s32.totalorder %s20, 1
    %p164 = por %p162, %p163
    %p165 = scmp.ne.s32.totalorder %s156, %s157
    %p166 = scmp.eq.s32.totalorder %s20, 0
    %p167 = por %p165, %p166
    %p168 = scmp.ne.s32.totalorder %s156, %s157
    %p169 = scmp.eq.s32.totalorder %s21, 1
    %p170 = por %p168, %p169
    %p172 = scmp.ne.s32.totalorder %s157, %s171
    %p173 = scmp.eq.s32.totalorder %s21, 0
    %p174 = por %p172, %p173
    %s175 = ssub.s32 %s15, %s22
    %p176 = scmp.eq.s32.totalorder %s175, 0
    %s178 = sadd.s32 %s177, 1
    %s179 = scalar_select %p176, %s177, %s178
    %p182 = pneg %p176
    %p183 = scmp.eq.s32.totalorder %s15, 1
    %p184 = por %p182, %p183
    %p185 = scmp.ne.s32.totalorder %s177, %s180
    %p186 = scmp.eq.s32.totalorder %s15, 0
    %p187 = por %p185, %p186
    %p188 = scmp.ne.s32.totalorder %s177, %s180
    %p189 = scmp.eq.s32.totalorder %s20, 1
    %p190 = por %p188, %p189
    %p191 = scmp.ne.s32.totalorder %s180, %s181
    %p192 = scmp.eq.s32.totalorder %s20, 0
    %p193 = por %p191, %p192
    %p194 = scmp.ne.s32.totalorder %s180, %s181
    %p195 = scmp.eq.s32.totalorder %s21, 1
    %p196 = por %p194, %p195
    %p198 = scmp.ne.s32.totalorder %s181, %s197
    %p199 = scmp.eq.s32.totalorder %s21, 0
    %p200 = por %p198, %p199
    %p201 = scmp.le.s32.totalorder 1, %s15
    %p202 = scmp.lt.s32.totalorder %s15, 3
    %p203 = pnand %p201, %p202
    %p204 = pneg %p203
    // Predicated region
    $region9: #{_lambda_.5} parent=5 // pred_check
      _
    $region10: #{_lambda_.5} parent=5 // pred_check_branch
      %206 = sbr.rel (%p203) target = $region12
    $region11: #{_lambda_.5} parent=5 // pred_region
      %s207 = ssub.s32 %s15, 1
      // Predicated region
      $region13: #{_lambda_.5} parent=11 // pred_check
        %p208 = pneg %p62
      $region14: #{_lambda_.5} parent=11 // pred_check_branch
        %210 = sbr.rel (%p208) target = $region16
      $region15: #{_lambda_.5} parent=11 // pred_region
        _
      $region16: #{_lambda_.5} parent=11 // pred_fallthru
        _
      // Predicated region
      $region17: #{_lambda_.5} parent=11 // pred_check
        %p211 = pneg %p83
      $region18: #{_lambda_.5} parent=11 // pred_check_branch
        %213 = sbr.rel (%p211) target = $region20
      $region19: #{_lambda_.5} parent=11 // pred_region
        _
      $region20: #{_lambda_.5} parent=11 // pred_fallthru
        _
      // Predicated region
      $region21: #{_lambda_.5} parent=11 // pred_check
        %p214 = pneg %p104
      $region22: #{_lambda_.5} parent=11 // pred_check_branch
        %216 = sbr.rel (%p214) target = $region24
      $region23: #{_lambda_.5} parent=11 // pred_region
        _
      $region24: #{_lambda_.5} parent=11 // pred_fallthru
        _
      // Predicated region
      $region25: #{_lambda_.5} parent=11 // pred_check
        %p217 = pneg %p125
      $region26: #{_lambda_.5} parent=11 // pred_check_branch
        %219 = sbr.rel (%p217) target = $region28
      $region27: #{_lambda_.5} parent=11 // pred_region
        _
      $region28: #{_lambda_.5} parent=11 // pred_fallthru
        _
      // Predicated region
      $region29: #{_lambda_.5} parent=11 // pred_check
        %p220 = pneg %p146
      $region30: #{_lambda_.5} parent=11 // pred_check_branch
        %222 = sbr.rel (%p220) target = $region32
      $region31: #{_lambda_.5} parent=11 // pred_region
        _
      $region32: #{_lambda_.5} parent=11 // pred_fallthru
        _
      // Predicated region
      $region33: #{_lambda_.5} parent=11 // pred_check
        %p223 = pneg %p167
      $region34: #{_lambda_.5} parent=11 // pred_check_branch
        %225 = sbr.rel (%p223) target = $region36
      $region35: #{_lambda_.5} parent=11 // pred_region
        _
      $region36: #{_lambda_.5} parent=11 // pred_fallthru
        _
    $region12: #{_lambda_.5} parent=5 // pred_fallthru
      _
    %p226 = scmp.lt.s32.totalorder %s15, 2
    // Predicated region
    $region37: #{_lambda_.5} parent=5 // pred_check
      %p227 = pneg %p226
    $region38: #{_lambda_.5} parent=5 // pred_check_branch
      %229 = sbr.rel (%p227) target = $region40
    $region39: #{_lambda_.5} parent=5 // pred_region
      // Predicated region
      $region41: #{_lambda_.5} parent=39 // pred_check
        %p230 = pneg %p35
      $region42: #{_lambda_.5} parent=39 // pred_check_branch
        %232 = sbr.rel (%p230) target = $region44
      $region43: #{_lambda_.5} parent=39 // pred_region
        %s233 = smul.u32 2, %s15
        %p234 = scmp.lt.s32.totalorder %s233, 3
        %s235 = scalar_select %p234, %s233, 3
        %s236 = smul.addr %s235, 2
        %s237 = smul.addr %s236, 4
        %s238 = scalar_lea.vmem %s0, %s237
        %s239 = smul.u32 2, %s15
      $region44: #{_lambda_.5} parent=39 // pred_fallthru
        _
    $region40: #{_lambda_.5} parent=5 // pred_fallthru
      _
    %p240 = scmp.le.s32.totalorder 1, %s15
    %p241 = scmp.lt.s32.totalorder %s15, 3
    %p242 = pnand %p240, %p241
    %p243 = pneg %p242
    // Predicated region
    $region45: #{_lambda_.5} parent=5 // pred_check
      _
    $region46: #{_lambda_.5} parent=5 // pred_check_branch
      %245 = sbr.rel (%p242) target = $region48
    $region47: #{_lambda_.5} parent=5 // pred_region
      %s246 = ssub.s32 %s15, 1
      %s247 = smul.u32 2, %s20
      %p248 = scmp.lt.s32.totalorder %s247, 3
      %s249 = scalar_select %p248, %s247, 3
      %s250 = smul.addr %s249, 2
      %s251 = smul.addr %s250, 4
      %s252 = scalar_lea.vmem %s0, %s251
      %p253 = pneg %p41
      %p254 = pneg %p38
      %p255 = pneg %p62
      %p256 = pneg %p59
      %p257 = pneg %p83
      %p258 = pneg %p80
      %p259 = pneg %p104
      %p260 = pneg %p101
      %p261 = pneg %p125
      %p262 = pneg %p122
      %p263 = pneg %p146
      %p264 = pneg %p143
      %p265 = pneg %p167
      %p266 = pneg %p164
      %p267 = pneg %p193
      %p268 = pneg %p190
      %s269 = smul.u32 2, %s20
      %p270 = scmp.lt.s32.totalorder %s269, 3
      %s271 = scalar_select %p270, %s269, 3
      %s272 = smul.addr %s271, 4
      %s273 = scalar_lea.vmem %s7, %s272
      %s274 = smul.u32 2, %s20
      %p275 = scmp.lt.s32.totalorder %s274, 3
      %s276 = scalar_select %p275, %s274, 3
      %s277 = smul.addr %s276, 2
      %s278 = smul.addr %s277, 4
      %s279 = scalar_lea.vmem %s0, %s278
      %s280 = smul.u32 2, %s20
      %s281 = smul.u32 2, %s20
      %p282 = scmp.lt.s32.totalorder %s281, 3
      %s283 = scalar_select %p282, %s281, 3
      %s284 = smul.addr %s283, 4
      %s285 = scalar_lea.vmem %s7, %s284
      %s286 = smul.u32 2, %s20
      %v288 = vld [vmem:[%s279] sm:$0xff]
      %v289 = vld [vmem:[%s279 + $0x8] sm:$0xff]
      %v290 = vld [vmem:[%s1] sm:$0xf]
      %v291 = vld [vmem:[%s1 + $0x4] sm:$0xf]
      %v292 = vld [vmem:[%s1 + $0x8] sm:$0xf]
      %v293 = vld [vmem:[%s1 + $0xc] sm:$0xf]
      %v294 = vld [vmem:[%s1 + $0x10] sm:$0xf]
      %v295 = vld [vmem:[%s1 + $0x14] sm:$0xf]
      %v296 = vld [vmem:[%s1 + $0x18] sm:$0xf]
      %v297 = vld [vmem:[%s1 + $0x1c] sm:$0xf]
      %v298 = vld [vmem:[%s1 + $0x20] sm:$0xf]
      %v299 = vld [vmem:[%s1 + $0x24] sm:$0xf]
      %v300 = vld [vmem:[%s1 + $0x28] sm:$0xf]
      %v301 = vld [vmem:[%s1 + $0x2c] sm:$0xf]
      %v302 = vld [vmem:[%s1 + $0x30] sm:$0xf]
      %v303 = vld [vmem:[%s1 + $0x34] sm:$0xf]
      %v304 = vld [vmem:[%s1 + $0x38] sm:$0xf]
      %v305 = vld [vmem:[%s1 + $0x3c] sm:$0xf]
      %v306 = vld [vmem:[%s1 + $0x40] sm:$0xf]
      %v307 = vld [vmem:[%s1 + $0x44] sm:$0xf]
      %v308 = vld [vmem:[%s1 + $0x48] sm:$0xf]
      %v309 = vld [vmem:[%s1 + $0x4c] sm:$0xf]
      %v310 = vld [vmem:[%s1 + $0x50] sm:$0xf]
      %v311 = vld [vmem:[%s1 + $0x54] sm:$0xf]
      %v312 = vld [vmem:[%s1 + $0x58] sm:$0xf]
      %v313 = vld [vmem:[%s1 + $0x5c] sm:$0xf]
      %v314 = vld [vmem:[%s1 + $0x60] sm:$0xf]
      %v315 = vld [vmem:[%s1 + $0x64] sm:$0xf]
      %v316 = vld [vmem:[%s1 + $0x68] sm:$0xf]
      %v317 = vld [vmem:[%s1 + $0x6c] sm:$0xf]
      %v318 = vld [vmem:[%s1 + $0x70] sm:$0xf]
      %v319 = vld [vmem:[%s1 + $0x74] sm:$0xf]
      %v320 = vld [vmem:[%s1 + $0x78] sm:$0xf]
      %v321 = vld [vmem:[%s1 + $0x7c] sm:$0xf]
      %v322 = vld [vmem:[%s2] sm:$0x1]
      %s323 = sld [smem:[#allocation2]]
      %v324 = vld [vmem:[%s4] sm:$0xf]
      %v325 = vld [vmem:[%s5] sm:$0x1]
      %s326 = sld [smem:[#allocation3]]
      %v328 = vperm.slane %v322, 0
      %v332 = vunpack.c.l.b16 %v288
      %v333 = vunpack.c.h.b16 %v288
      %v334 = vunpack.c.l.b16 %v289
      %v335 = vunpack.c.h.b16 %v289
      %v336 = vpack.c.b16 %v334, %v332
      %v337 = vpack.c.b16 %v335, %v333
      %v372 = vunpack.c.l.b16 %v290
      %v373 = vunpack.c.l.b16 %v291
      %v374 = vunpack.c.l.b16 %v292
      %v375 = vunpack.c.l.b16 %v293
      %v376 = vunpack.c.l.b16 %v294
      %v377 = vunpack.c.l.b16 %v295
      %v378 = vunpack.c.l.b16 %v296
      %v379 = vunpack.c.l.b16 %v297
      %v380 = vunpack.c.l.b16 %v298
      %v381 = vunpack.c.l.b16 %v299
      %v382 = vunpack.c.l.b16 %v300
      %v383 = vunpack.c.l.b16 %v301
      %v384 = vunpack.c.l.b16 %v302
      %v385 = vunpack.c.l.b16 %v303
      %v386 = vunpack.c.l.b16 %v304
      %v387 = vunpack.c.l.b16 %v305
      %v388 = vunpack.c.l.b16 %v306
      %v389 = vunpack.c.l.b16 %v307
      %v390 = vunpack.c.l.b16 %v308
      %v391 = vunpack.c.l.b16 %v309
      %v392 = vunpack.c.l.b16 %v310
      %v393 = vunpack.c.l.b16 %v311
      %v394 = vunpack.c.l.b16 %v312
      %v395 = vunpack.c.l.b16 %v313
      %v396 = vunpack.c.l.b16 %v314
      %v397 = vunpack.c.l.b16 %v315
      %v398 = vunpack.c.l.b16 %v316
      %v399 = vunpack.c.l.b16 %v317
      %v400 = vunpack.c.l.b16 %v318
      %v401 = vunpack.c.l.b16 %v319
      %v402 = vunpack.c.l.b16 %v320
      %v403 = vunpack.c.l.b16 %v321
      %v404 = vpack.c.b16 %v373, %v372
      %v405 = vpack.c.b16 %v375, %v374
      %v406 = vpack.c.b16 %v377, %v376
      %v407 = vpack.c.b16 %v379, %v378
      %v408 = vpack.c.b16 %v381, %v380
      %v409 = vpack.c.b16 %v383, %v382
      %v410 = vpack.c.b16 %v385, %v384
      %v411 = vpack.c.b16 %v387, %v386
      %v412 = vpack.c.b16 %v389, %v388
      %v413 = vpack.c.b16 %v391, %v390
      %v414 = vpack.c.b16 %v393, %v392
      %v415 = vpack.c.b16 %v395, %v394
      %v416 = vpack.c.b16 %v397, %v396
      %v417 = vpack.c.b16 %v399, %v398
      %v418 = vpack.c.b16 %v401, %v400
      %v419 = vpack.c.b16 %v403, %v402
      %436 = vmatpush.bf16.msra.mxu0 %v411
      %437 = vmatpush.bf16.msra.mxu0 %v410
      %438 = vmatpush.bf16.msra.mxu0 %v409
      %439 = vmatpush.bf16.msra.mxu0 %v408
      %440 = vmatpush.bf16.msra.mxu0 %v407
      %441 = vmatpush.bf16.msra.mxu0 %v406
      %442 = vmatpush.bf16.msra.mxu0 %v405
      %443 = vmatpush.bf16.msra.mxu0 %v404
      %444 = vmatmul.bf16.gmra.mxu0 %v336
      %v445 = vpop.f32.mrf.mxu0
      %v446 = vadd.f32 %v328, %v445
      %v447 = vpop.f32.mrf.mxu0
      %v448 = vadd.f32 %v328, %v447
      %449 = vdwg.mxu0
      %450 = vmatpush.bf16.msra.mxu0 %v419
      %451 = vmatpush.bf16.msra.mxu0 %v418
      %452 = vmatpush.bf16.msra.mxu0 %v417
      %453 = vmatpush.bf16.msra.mxu0 %v416
      %454 = vmatpush.bf16.msra.mxu0 %v415
      %455 = vmatpush.bf16.msra.mxu0 %v414
      %456 = vmatpush.bf16.msra.mxu0 %v413
      %457 = vmatpush.bf16.msra.mxu0 %v412
      %458 = vmatmul.bf16.gmra.mxu0 %v337
      %v459 = vpop.f32.mrf.mxu0
      %v460 = vadd.f32 %v446, %v459
      %v461 = vpop.f32.mrf.mxu0
      %v462 = vadd.f32 %v448, %v461
      %463 = vdwg.mxu0
      %vm464 = vcmp.gt.f32.partialorder %v460, 0.0
      %vm465 = vcmp.gt.f32.partialorder %v462, 0.0
      %v466 = vstv %s323
      %v467 = vmul.f32 %v466, %v460
      %v468 = vmul.f32 %v466, %v462
      %v469 = vsel %vm464, %v460, %v467
      %v470 = vsel %vm465, %v462, %v468
      %v471 = vpack.c.bf16 %v470, %v469
      %v473 = vperm.slane %v325, 0
      %vm475 = vcmask 64512
      %v477 = vsel %vm475, %v471, 0
      %vm479 = vcmask 1043456
      %v481 = vsel %vm479, %v324, 0
      %483 = vmatpush.bf16.msra.mxu0 0
      %484 = vmatpush.bf16.msra.mxu0 0
      %485 = vmatpush.bf16.msra.mxu0 0
      %486 = vmatpush.bf16.msra.mxu0 0
      %487 = vmatpush.bf16.msra.mxu0 0
      %488 = vmatpush.bf16.msra.mxu0 0
      %489 = vmatpush.bf16.msra.mxu0 0
      %490 = vmatpush.bf16.msra.mxu0 %v481
      %491 = vmatmul.bf16.gmra.mxu0 %v477
      %v492 = vpop.f32.mrf.mxu0
      %v493 = vadd.f32 %v473, %v492
      %v494 = vpop.f32.mrf.mxu0
      %v495 = vadd.f32 %v473, %v494
      %496 = vdwg.mxu0
      %vm497 = vcmp.gt.f32.partialorder %v493, 0.0
      %vm498 = vcmp.gt.f32.partialorder %v495, 0.0
      %v499 = vstv %s326
      %v500 = vmul.f32 %v499, %v493
      %v501 = vmul.f32 %v499, %v495
      %v502 = vsel %vm497, %v493, %v500
      %v503 = vsel %vm498, %v495, %v501
      %v504 = vpack.c.bf16 %v502, %v502
      %v505 = vpack.c.bf16 %v503, %v503
      %vm506 = vcmask 60416
      %507 = vst.msk [vmem:[%s285] sm:$0xf] %vm506, %v504
      %508 = vst.msk [vmem:[%s285 + $0x4] sm:$0xf] %vm506, %v505
      %s509 = smul.u32 2, %s20
      %p510 = scmp.lt.s32.totalorder %s509, 3
      %s511 = scalar_select %p510, %s509, 3
      %s512 = smul.addr %s511, 4
      %s513 = scalar_lea.vmem %s7, %s512
      // Predicated region
      $region49: #{_lambda_.5} parent=47 // pred_check
        %p514 = pneg %p190
      $region50: #{_lambda_.5} parent=47 // pred_check_branch
        %516 = sbr.rel (%p514) target = $region52
      $region51: #{_lambda_.5} parent=47 // pred_region
        %s517 = smul.u32 2, %s20
      $region52: #{_lambda_.5} parent=47 // pred_fallthru
        _
    $region48: #{_lambda_.5} parent=5 // pred_fallthru
      _
    %p518 = scmp.le.s32.totalorder 2, %s15
    // Predicated region
    $region53: #{_lambda_.5} parent=5 // pred_check
      %p519 = pneg %p518
    $region54: #{_lambda_.5} parent=5 // pred_check_branch
      %521 = sbr.rel (%p519) target = $region56
    $region55: #{_lambda_.5} parent=5 // pred_region
      %s522 = ssub.s32 %s15, 2
      // Predicated region
      $region57: #{_lambda_.5} parent=55 // pred_check
        %p523 = pneg %p196
      $region58: #{_lambda_.5} parent=55 // pred_check_branch
        %525 = sbr.rel (%p523) target = $region60
      $region59: #{_lambda_.5} parent=55 // pred_region
        %s526 = smul.u32 2, %s21
        %p527 = scmp.lt.s32.totalorder %s526, 3
        %s528 = scalar_select %p527, %s526, 3
        %s529 = smul.addr %s528, 4
        %s530 = scalar_lea.vmem %s7, %s529
      $region60: #{_lambda_.5} parent=55 // pred_fallthru
        _
    $region56: #{_lambda_.5} parent=5 // pred_fallthru
      _
  $region6: #{_lambda_.5} parent=0 // loop_footer
    %s19 = sadd.s32 1, %s15
  $region7: #{_lambda_.5} parent=0 // loop_footer_branch
    %14 = sbr.rel target = $region3
  $region8: #{_lambda_.5} parent=0 // loop_exit
    _

// kernel: _lambda_.6
$region0: #{_lambda_.6}
  #allocation0 [shape = 'u32[]', space=smem, size = 0x4, offset = 0x4, fixed_abs, tag = 'smem constant byte address 0x4 - core index']
  #allocation1 [shape = 'u32[72,128]{1,0:T(1,128)}', space=vmem, size = 0x9000, scoped, tag = 'internal scratch']
  #allocation2 [shape = 'f32[1,1]{1,0:T(1,128)S(6)}', space=smem, size = 0x200, scoped, tag = 'scoped memory for _lambda_.6']
  %s0 = inlined_call_operand.vmem [shape: bf16[8,128], index: 0, kind: input, shape index: {}]
  %s1 = inlined_call_operand.vmem [shape: bf16[128,128], index: 1, kind: input, shape index: {}]
  %s2 = inlined_call_operand.vmem [shape: f32[1,128], index: 2, kind: input, shape index: {}]
  %s3 = inlined_call_operand.<no memory space> [shape: f32[1,1], index: 3, kind: input, shape index: {}]
  %s4 = inlined_call_operand.vmem [shape: bf16[8,128], index: 4, kind: input, shape index: {}]
  %s5 = inlined_call_operand.vmem [shape: bf16[8,128], index: 5, kind: output, shape index: {}]
  %s6 = sld [smem:[#allocation0]]
  $region30: #{_lambda_.6} parent=0
    _
  %s8 = ssub.s32 1, %s6
  %s9 = scalar_select 0, %s8, %s6
  %10 = sst [smem:[#allocation2]] %s3
  // Predicated region
  $region2: #{_lambda_.6} parent=0 // pred_check
    _
  $region3: #{_lambda_.6} parent=0 // pred_check_branch
    %12 = sbr.rel (0) target = $region5
  $region4: #{_lambda_.6} parent=0 // pred_region
    _
  $region5: #{_lambda_.6} parent=0 // pred_fallthru
    _
  // Predicated region
  $region6: #{_lambda_.6} parent=0 // pred_check
    _
  $region7: #{_lambda_.6} parent=0 // pred_check_branch
    %14 = sbr.rel (0) target = $region9
  $region8: #{_lambda_.6} parent=0 // pred_region
    _
  $region9: #{_lambda_.6} parent=0 // pred_fallthru
    _
  // Predicated region
  $region10: #{_lambda_.6} parent=0 // pred_check
    _
  $region11: #{_lambda_.6} parent=0 // pred_check_branch
    %16 = sbr.rel (0) target = $region13
  $region12: #{_lambda_.6} parent=0 // pred_region
    _
  $region13: #{_lambda_.6} parent=0 // pred_fallthru
    _
  // Predicated region
  $region14: #{_lambda_.6} parent=0 // pred_check
    _
  $region15: #{_lambda_.6} parent=0 // pred_check_branch
    %18 = sbr.rel (0) target = $region17
  $region16: #{_lambda_.6} parent=0 // pred_region
    _
  $region17: #{_lambda_.6} parent=0 // pred_fallthru
    _
  // Predicated region
  $region18: #{_lambda_.6} parent=0 // pred_check
    _
  $region19: #{_lambda_.6} parent=0 // pred_check_branch
    %20 = sbr.rel (0) target = $region21
  $region20: #{_lambda_.6} parent=0 // pred_region
    _
  $region21: #{_lambda_.6} parent=0 // pred_fallthru
    _
  %v21 = vld [vmem:[%s0] sm:$0xf]
  %v22 = vld [vmem:[%s1] sm:$0xf]
  %v23 = vld [vmem:[%s1 + $0x4] sm:$0xf]
  %v24 = vld [vmem:[%s1 + $0x8] sm:$0xf]
  %v25 = vld [vmem:[%s1 + $0xc] sm:$0xf]
  %v26 = vld [vmem:[%s1 + $0x10] sm:$0xf]
  %v27 = vld [vmem:[%s1 + $0x14] sm:$0xf]
  %v28 = vld [vmem:[%s1 + $0x18] sm:$0xf]
  %v29 = vld [vmem:[%s1 + $0x1c] sm:$0xf]
  %v30 = vld [vmem:[%s1 + $0x20] sm:$0xf]
  %v31 = vld [vmem:[%s1 + $0x24] sm:$0xf]
  %v32 = vld [vmem:[%s1 + $0x28] sm:$0xf]
  %v33 = vld [vmem:[%s1 + $0x2c] sm:$0xf]
  %v34 = vld [vmem:[%s1 + $0x30] sm:$0xf]
  %v35 = vld [vmem:[%s1 + $0x34] sm:$0xf]
  %v36 = vld [vmem:[%s1 + $0x38] sm:$0xf]
  %v37 = vld [vmem:[%s1 + $0x3c] sm:$0xf]
  %v38 = vld [vmem:[%s2] sm:$0x1]
  %s39 = sld [smem:[#allocation2]]
  %v40 = vld [vmem:[%s4] sm:$0xf]
  %v42 = vperm.slane %v38, 0
  %v60 = vunpack.c.l.b16 %v22
  %v61 = vunpack.c.l.b16 %v23
  %v62 = vunpack.c.l.b16 %v24
  %v63 = vunpack.c.l.b16 %v25
  %v64 = vunpack.c.l.b16 %v26
  %v65 = vunpack.c.l.b16 %v27
  %v66 = vunpack.c.l.b16 %v28
  %v67 = vunpack.c.l.b16 %v29
  %v68 = vunpack.c.l.b16 %v30
  %v69 = vunpack.c.l.b16 %v31
  %v70 = vunpack.c.l.b16 %v32
  %v71 = vunpack.c.l.b16 %v33
  %v72 = vunpack.c.l.b16 %v34
  %v73 = vunpack.c.l.b16 %v35
  %v74 = vunpack.c.l.b16 %v36
  %v75 = vunpack.c.l.b16 %v37
  %v76 = vpack.c.b16 %v61, %v60
  %v77 = vpack.c.b16 %v63, %v62
  %v78 = vpack.c.b16 %v65, %v64
  %v79 = vpack.c.b16 %v67, %v66
  %v80 = vpack.c.b16 %v69, %v68
  %v81 = vpack.c.b16 %v71, %v70
  %v82 = vpack.c.b16 %v73, %v72
  %v83 = vpack.c.b16 %v75, %v74
  %92 = vmatpush.bf16.msra.mxu0 %v83
  %93 = vmatpush.bf16.msra.mxu0 %v82
  %94 = vmatpush.bf16.msra.mxu0 %v81
  %95 = vmatpush.bf16.msra.mxu0 %v80
  %96 = vmatpush.bf16.msra.mxu0 %v79
  %97 = vmatpush.bf16.msra.mxu0 %v78
  %98 = vmatpush.bf16.msra.mxu0 %v77
  %99 = vmatpush.bf16.msra.mxu0 %v76
  %100 = vmatmul.bf16.gmra.mxu0 %v21
  %v101 = vpop.f32.mrf.mxu0
  %v102 = vadd.f32 %v42, %v101
  %v103 = vpop.f32.mrf.mxu0
  %104 = vdwg.mxu0
  %vm105 = vcmp.gt.f32.partialorder %v102, 0.0
  %v106 = vstv %s39
  %v107 = vmul.f32 %v106, %v102
  %v108 = vsel %vm105, %v102, %v107
  %v109 = vunpack.c.l.bf16 %v40
  %v110 = vsub.f32 %v109, %v108
  %v111 = vmax.f32 %v110, 0.0
  %v112 = vmul.f32 %v111, 0.1
  %v113 = vmul.f32 %v112, %v109
  %v114 = vadd.f32 %v109, %v113
  %v115 = vpack.c.bf16 %v114, %v114
  %116 = vst [vmem:[%s5] sm:$0xf] %v115
  // Predicated region
  $region22: #{_lambda_.6} parent=0 // pred_check
    _
  $region23: #{_lambda_.6} parent=0 // pred_check_branch
    %118 = sbr.rel (0) target = $region25
  $region24: #{_lambda_.6} parent=0 // pred_region
    _
  $region25: #{_lambda_.6} parent=0 // pred_fallthru
    _
  // Predicated region
  $region26: #{_lambda_.6} parent=0 // pred_check
    _
  $region27: #{_lambda_.6} parent=0 // pred_check_branch
    %120 = sbr.rel (0) target = $region29
  $region28: #{_lambda_.6} parent=0 // pred_region
    _
  $region29: #{_lambda_.6} parent=0 // pred_fallthru
    _

// kernel: _lambda_.7
$region0: #{_lambda_.7}
  #allocation0 [shape = 'u32[]', space=smem, size = 0x4, offset = 0x4, fixed_abs, tag = 'smem constant byte address 0x4 - core index']
  #allocation1 [shape = 'u32[72,128]{1,0:T(1,128)}', space=vmem, size = 0x9000, scoped, tag = 'internal scratch']
  #allocation2 [shape = 'f32[1,1]{1,0:T(1,128)S(6)}', space=smem, size = 0x200, scoped, tag = 'scoped memory for _lambda_.7']
  %s0 = inlined_call_operand.vmem [shape: bf16[32,128], index: 0, kind: input, shape index: {}]
  %s1 = inlined_call_operand.vmem [shape: bf16[128,128], index: 1, kind: input, shape index: {}]
  %s2 = inlined_call_operand.vmem [shape: f32[1,128], index: 2, kind: input, shape index: {}]
  %s3 = inlined_call_operand.<no memory space> [shape: f32[1,1], index: 3, kind: input, shape index: {}]
  %s4 = inlined_call_operand.vmem [shape: bf16[32,128], index: 4, kind: output, shape index: {}]
  %s5 = sld [smem:[#allocation0]]
  $region49: #{_lambda_.7} parent=0
    _
  %s7 = ssub.s32 1, %s5
  %s8 = scalar_select 0, %s7, %s5
  %9 = sst [smem:[#allocation2]] %s3
  loop: start=0, step=1, limit=4
  $region2: #{_lambda_.7} parent=0 // loop_pre_header
    _
  $region3: #{_lambda_.7} parent=0 // loop_header
    %s11 = sphi 0, %s15
    %p12 = scmp.ge.s32.totalorder %s11, 4
    %s21 = sphi 0, %s23
    %s24 = sphi 0, %s21
    %s25 = sphi 0, %s24
    %s41 = sphi 0, %s25
    %s45 = sphi 0, %s45
    %s47 = sphi 0, %s45
    %s48 = sphi 0, %s47
    %s62 = sphi 0, %s48
    %s66 = sphi 0, %s66
    %s68 = sphi 0, %s66
    %s69 = sphi 0, %s68
    %s83 = sphi 0, %s69
    %s87 = sphi 0, %s87
    %s89 = sphi 0, %s87
    %s90 = sphi 0, %s89
    %s104 = sphi 0, %s90
    %s110 = sphi 0, %s112
    %s113 = sphi 0, %s110
    %s114 = sphi 0, %s113
    %s130 = sphi 0, %s114
  $region4: #{_lambda_.7} parent=0 // loop_header_branch
    %14 = sbr.rel (%p12) target = $region8
  $region5: #{_lambda_.7} parent=0 // loop_body
    %s16 = ssub.s32 %s11, 1
    %s17 = ssub.s32 %s11, 2
    %s18 = sadd.s32 %s11, 1
    %s19 = ssub.s32 %s11, %s18
    %p20 = scmp.eq.s32.totalorder %s19, 0
    %s22 = sadd.s32 %s21, 1
    %s23 = scalar_select %p20, %s21, %s22
    %p26 = pneg %p20
    %p27 = scmp.eq.s32.totalorder %s11, 1
    %p28 = por %p26, %p27
    %p29 = scmp.ne.s32.totalorder %s21, %s24
    %p30 = scmp.eq.s32.totalorder %s11, 0
    %p31 = por %p29, %p30
    %p32 = scmp.ne.s32.totalorder %s21, %s24
    %p33 = scmp.eq.s32.totalorder %s16, 1
    %p34 = por %p32, %p33
    %p35 = scmp.ne.s32.totalorder %s24, %s25
    %p36 = scmp.eq.s32.totalorder %s16, 0
    %p37 = por %p35, %p36
    %p38 = scmp.ne.s32.totalorder %s24, %s25
    %p39 = scmp.eq.s32.totalorder %s17, 1
    %p40 = por %p38, %p39
    %p42 = scmp.ne.s32.totalorder %s25, %s41
    %p43 = scmp.eq.s32.totalorder %s17, 0
    %p44 = por %p42, %p43
    %s46 = sadd.s32 %s45, 1
    %p49 = scmp.eq.s32.totalorder %s11, 1
    %p50 = scmp.ne.s32.totalorder %s45, %s47
    %p51 = scmp.eq.s32.totalorder %s11, 0
    %p52 = por %p50, %p51
    %p53 = scmp.ne.s32.totalorder %s45, %s47
    %p54 = scmp.eq.s32.totalorder %s16, 1
    %p55 = por %p53, %p54
    %p56 = scmp.ne.s32.totalorder %s47, %s48
    %p57 = scmp.eq.s32.totalorder %s16, 0
    %p58 = por %p56, %p57
    %p59 = scmp.ne.s32.totalorder %s47, %s48
    %p60 = scmp.eq.s32.totalorder %s17, 1
    %p61 = por %p59, %p60
    %p63 = scmp.ne.s32.totalorder %s48, %s62
    %p64 = scmp.eq.s32.totalorder %s17, 0
    %p65 = por %p63, %p64
    %s67 = sadd.s32 %s66, 1
    %p70 = scmp.eq.s32.totalorder %s11, 1
    %p71 = scmp.ne.s32.totalorder %s66, %s68
    %p72 = scmp.eq.s32.totalorder %s11, 0
    %p73 = por %p71, %p72
    %p74 = scmp.ne.s32.totalorder %s66, %s68
    %p75 = scmp.eq.s32.totalorder %s16, 1
    %p76 = por %p74, %p75
    %p77 = scmp.ne.s32.totalorder %s68, %s69
    %p78 = scmp.eq.s32.totalorder %s16, 0
    %p79 = por %p77, %p78
    %p80 = scmp.ne.s32.totalorder %s68, %s69
    %p81 = scmp.eq.s32.totalorder %s17, 1
    %p82 = por %p80, %p81
    %p84 = scmp.ne.s32.totalorder %s69, %s83
    %p85 = scmp.eq.s32.totalorder %s17, 0
    %p86 = por %p84, %p85
    %s88 = sadd.s32 %s87, 1
    %p91 = scmp.eq.s32.totalorder %s11, 1
    %p92 = scmp.ne.s32.totalorder %s87, %s89
    %p93 = scmp.eq.s32.totalorder %s11, 0
    %p94 = por %p92, %p93
    %p95 = scmp.ne.s32.totalorder %s87, %s89
    %p96 = scmp.eq.s32.totalorder %s16, 1
    %p97 = por %p95, %p96
    %p98 = scmp.ne.s32.totalorder %s89, %s90
    %p99 = scmp.eq.s32.totalorder %s16, 0
    %p100 = por %p98, %p99
    %p101 = scmp.ne.s32.totalorder %s89, %s90
    %p102 = scmp.eq.s32.totalorder %s17, 1
    %p103 = por %p101, %p102
    %p105 = scmp.ne.s32.totalorder %s90, %s104
    %p106 = scmp.eq.s32.totalorder %s17, 0
    %p107 = por %p105, %p106
    %s108 = ssub.s32 %s11, %s18
    %p109 = scmp.eq.s32.totalorder %s108, 0
    %s111 = sadd.s32 %s110, 1
    %s112 = scalar_select %p109, %s110, %s111
    %p115 = pneg %p109
    %p116 = scmp.eq.s32.totalorder %s11, 1
    %p117 = por %p115, %p116
    %p118 = scmp.ne.s32.totalorder %s110, %s113
    %p119 = scmp.eq.s32.totalorder %s11, 0
    %p120 = por %p118, %p119
    %p121 = scmp.ne.s32.totalorder %s110, %s113
    %p122 = scmp.eq.s32.totalorder %s16, 1
    %p123 = por %p121, %p122
    %p124 = scmp.ne.s32.totalorder %s113, %s114
    %p125 = scmp.eq.s32.totalorder %s16, 0
    %p126 = por %p124, %p125
    %p127 = scmp.ne.s32.totalorder %s113, %s114
    %p128 = scmp.eq.s32.totalorder %s17, 1
    %p129 = por %p127, %p128
    %p131 = scmp.ne.s32.totalorder %s114, %s130
    %p132 = scmp.eq.s32.totalorder %s17, 0
    %p133 = por %p131, %p132
    %p134 = scmp.le.s32.totalorder 1, %s11
    %p135 = scmp.lt.s32.totalorder %s11, 3
    %p136 = pnand %p134, %p135
    %p137 = pneg %p136
    // Predicated region
    $region9: #{_lambda_.7} parent=5 // pred_check
      _
    $region10: #{_lambda_.7} parent=5 // pred_check_branch
      %139 = sbr.rel (%p136) target = $region12
    $region11: #{_lambda_.7} parent=5 // pred_region
      %s140 = ssub.s32 %s11, 1
      // Predicated region
      $region13: #{_lambda_.7} parent=11 // pred_check
        %p141 = pneg %p58
      $region14: #{_lambda_.7} parent=11 // pred_check_branch
        %143 = sbr.rel (%p141) target = $region16
      $region15: #{_lambda_.7} parent=11 // pred_region
        _
      $region16: #{_lambda_.7} parent=11 // pred_fallthru
        _
      // Predicated region
      $region17: #{_lambda_.7} parent=11 // pred_check
        %p144 = pneg %p79
      $region18: #{_lambda_.7} parent=11 // pred_check_branch
        %146 = sbr.rel (%p144) target = $region20
      $region19: #{_lambda_.7} parent=11 // pred_region
        _
      $region20: #{_lambda_.7} parent=11 // pred_fallthru
        _
      // Predicated region
      $region21: #{_lambda_.7} parent=11 // pred_check
        %p147 = pneg %p100
      $region22: #{_lambda_.7} parent=11 // pred_check_branch
        %149 = sbr.rel (%p147) target = $region24
      $region23: #{_lambda_.7} parent=11 // pred_region
        _
      $region24: #{_lambda_.7} parent=11 // pred_fallthru
        _
    $region12: #{_lambda_.7} parent=5 // pred_fallthru
      _
    %p150 = scmp.lt.s32.totalorder %s11, 2
    // Predicated region
    $region25: #{_lambda_.7} parent=5 // pred_check
      %p151 = pneg %p150
    $region26: #{_lambda_.7} parent=5 // pred_check_branch
      %153 = sbr.rel (%p151) target = $region28
    $region27: #{_lambda_.7} parent=5 // pred_region
      // Predicated region
      $region29: #{_lambda_.7} parent=27 // pred_check
        %p154 = pneg %p31
      $region30: #{_lambda_.7} parent=27 // pred_check_branch
        %156 = sbr.rel (%p154) target = $region32
      $region31: #{_lambda_.7} parent=27 // pred_region
        %s157 = smul.u32 2, %s11
        %p158 = scmp.lt.s32.totalorder %s157, 3
        %s159 = scalar_select %p158, %s157, 3
        %s160 = smul.addr %s159, 4
        %s161 = scalar_lea.vmem %s0, %s160
        %s162 = smul.u32 2, %s11
      $region32: #{_lambda_.7} parent=27 // pred_fallthru
        _
    $region28: #{_lambda_.7} parent=5 // pred_fallthru
      _
    %p163 = scmp.le.s32.totalorder 1, %s11
    %p164 = scmp.lt.s32.totalorder %s11, 3
    %p165 = pnand %p163, %p164
    %p166 = pneg %p165
    // Predicated region
    $region33: #{_lambda_.7} parent=5 // pred_check
      _
    $region34: #{_lambda_.7} parent=5 // pred_check_branch
      %168 = sbr.rel (%p165) target = $region36
    $region35: #{_lambda_.7} parent=5 // pred_region
      %s169 = ssub.s32 %s11, 1
      %s170 = smul.u32 2, %s16
      %p171 = scmp.lt.s32.totalorder %s170, 3
      %s172 = scalar_select %p171, %s170, 3
      %s173 = smul.addr %s172, 4
      %s174 = scalar_lea.vmem %s0, %s173
      %p175 = pneg %p37
      %p176 = pneg %p34
      %p177 = pneg %p58
      %p178 = pneg %p55
      %p179 = pneg %p79
      %p180 = pneg %p76
      %p181 = pneg %p100
      %p182 = pneg %p97
      %p183 = pneg %p126
      %p184 = pneg %p123
      %s185 = smul.u32 2, %s16
      %p186 = scmp.lt.s32.totalorder %s185, 3
      %s187 = scalar_select %p186, %s185, 3
      %s188 = smul.addr %s187, 4
      %s189 = scalar_lea.vmem %s4, %s188
      %s190 = smul.u32 2, %s16
      %p191 = scmp.lt.s32.totalorder %s190, 3
      %s192 = scalar_select %p191, %s190, 3
      %s193 = smul.addr %s192, 4
      %s194 = scalar_lea.vmem %s0, %s193
      %s195 = smul.u32 2, %s16
      %s196 = smul.u32 2, %s16
      %p197 = scmp.lt.s32.totalorder %s196, 3
      %s198 = scalar_select %p197, %s196, 3
      %s199 = smul.addr %s198, 4
      %s200 = scalar_lea.vmem %s4, %s199
      %s201 = smul.u32 2, %s16
      %v202 = vld [vmem:[%s194] sm:$0xf]
      %v203 = vld [vmem:[%s194 + $0x4] sm:$0xf]
      %v204 = vld [vmem:[%s1] sm:$0xf]
      %v205 = vld [vmem:[%s1 + $0x4] sm:$0xf]
      %v206 = vld [vmem:[%s1 + $0x8] sm:$0xf]
      %v207 = vld [vmem:[%s1 + $0xc] sm:$0xf]
      %v208 = vld [vmem:[%s1 + $0x10] sm:$0xf]
      %v209 = vld [vmem:[%s1 + $0x14] sm:$0xf]
      %v210 = vld [vmem:[%s1 + $0x18] sm:$0xf]
      %v211 = vld [vmem:[%s1 + $0x1c] sm:$0xf]
      %v212 = vld [vmem:[%s1 + $0x20] sm:$0xf]
      %v213 = vld [vmem:[%s1 + $0x24] sm:$0xf]
      %v214 = vld [vmem:[%s1 + $0x28] sm:$0xf]
      %v215 = vld [vmem:[%s1 + $0x2c] sm:$0xf]
      %v216 = vld [vmem:[%s1 + $0x30] sm:$0xf]
      %v217 = vld [vmem:[%s1 + $0x34] sm:$0xf]
      %v218 = vld [vmem:[%s1 + $0x38] sm:$0xf]
      %v219 = vld [vmem:[%s1 + $0x3c] sm:$0xf]
      %v220 = vld [vmem:[%s2] sm:$0x1]
      %s221 = sld [smem:[#allocation2]]
      %v223 = vperm.slane %v220, 0
      %v227 = vunpack.c.l.b16 %v202
      %v228 = vunpack.c.l.b16 %v203
      %v229 = vpack.c.b16 %v228, %v227
      %v247 = vunpack.c.l.b16 %v204
      %v248 = vunpack.c.l.b16 %v205
      %v249 = vunpack.c.l.b16 %v206
      %v250 = vunpack.c.l.b16 %v207
      %v251 = vunpack.c.l.b16 %v208
      %v252 = vunpack.c.l.b16 %v209
      %v253 = vunpack.c.l.b16 %v210
      %v254 = vunpack.c.l.b16 %v211
      %v255 = vunpack.c.l.b16 %v212
      %v256 = vunpack.c.l.b16 %v213
      %v257 = vunpack.c.l.b16 %v214
      %v258 = vunpack.c.l.b16 %v215
      %v259 = vunpack.c.l.b16 %v216
      %v260 = vunpack.c.l.b16 %v217
      %v261 = vunpack.c.l.b16 %v218
      %v262 = vunpack.c.l.b16 %v219
      %v263 = vpack.c.b16 %v248, %v247
      %v264 = vpack.c.b16 %v250, %v249
      %v265 = vpack.c.b16 %v252, %v251
      %v266 = vpack.c.b16 %v254, %v253
      %v267 = vpack.c.b16 %v256, %v255
      %v268 = vpack.c.b16 %v258, %v257
      %v269 = vpack.c.b16 %v260, %v259
      %v270 = vpack.c.b16 %v262, %v261
      %279 = vmatpush.bf16.msra.mxu0 %v270
      %280 = vmatpush.bf16.msra.mxu0 %v269
      %281 = vmatpush.bf16.msra.mxu0 %v268
      %282 = vmatpush.bf16.msra.mxu0 %v267
      %283 = vmatpush.bf16.msra.mxu0 %v266
      %284 = vmatpush.bf16.msra.mxu0 %v265
      %285 = vmatpush.bf16.msra.mxu0 %v264
      %286 = vmatpush.bf16.msra.mxu0 %v263
      %287 = vmatmul.bf16.gmra.mxu0 %v229
      %v288 = vpop.f32.mrf.mxu0
      %v289 = vadd.f32 %v223, %v288
      %v290 = vpop.f32.mrf.mxu0
      %v291 = vadd.f32 %v223, %v290
      %292 = vdwg.mxu0
      %vm293 = vcmp.gt.f32.partialorder %v289, 0.0
      %vm294 = vcmp.gt.f32.partialorder %v291, 0.0
      %v295 = vstv %s221
      %v296 = vmul.f32 %v295, %v289
      %v297 = vmul.f32 %v295, %v291
      %v298 = vsel %vm293, %v289, %v296
      %v299 = vsel %vm294, %v291, %v297
      %v300 = vpack.c.bf16 %v298, %v298
      %v301 = vpack.c.bf16 %v299, %v299
      %302 = vst [vmem:[%s200] sm:$0xf] %v300
      %303 = vst [vmem:[%s200 + $0x4] sm:$0xf] %v301
      %s304 = smul.u32 2, %s16
      %p305 = scmp.lt.s32.totalorder %s304, 3
      %s306 = scalar_select %p305, %s304, 3
      %s307 = smul.addr %s306, 4
      %s308 = scalar_lea.vmem %s4, %s307
      // Predicated region
      $region37: #{_lambda_.7} parent=35 // pred_check
        %p309 = pneg %p123
      $region38: #{_lambda_.7} parent=35 // pred_check_branch
        %311 = sbr.rel (%p309) target = $region40
      $region39: #{_lambda_.7} parent=35 // pred_region
        %s312 = smul.u32 2, %s16
      $region40: #{_lambda_.7} parent=35 // pred_fallthru
        _
    $region36: #{_lambda_.7} parent=5 // pred_fallthru
      _
    %p313 = scmp.le.s32.totalorder 2, %s11
    // Predicated region
    $region41: #{_lambda_.7} parent=5 // pred_check
      %p314 = pneg %p313
    $region42: #{_lambda_.7} parent=5 // pred_check_branch
      %316 = sbr.rel (%p314) target = $region44
    $region43: #{_lambda_.7} parent=5 // pred_region
      %s317 = ssub.s32 %s11, 2
      // Predicated region
      $region45: #{_lambda_.7} parent=43 // pred_check
        %p318 = pneg %p129
      $region46: #{_lambda_.7} parent=43 // pred_check_branch
        %320 = sbr.rel (%p318) target = $region48
      $region47: #{_lambda_.7} parent=43 // pred_region
        %s321 = smul.u32 2, %s17
        %p322 = scmp.lt.s32.totalorder %s321, 3
        %s323 = scalar_select %p322, %s321, 3
        %s324 = smul.addr %s323, 4
        %s325 = scalar_lea.vmem %s4, %s324
      $region48: #{_lambda_.7} parent=43 // pred_fallthru
        _
    $region44: #{_lambda_.7} parent=5 // pred_fallthru
      _
  $region6: #{_lambda_.7} parent=0 // loop_footer
    %s15 = sadd.s32 1, %s11
  $region7: #{_lambda_.7} parent=0 // loop_footer_branch
    %10 = sbr.rel target = $region3
  $region8: #{_lambda_.7} parent=0 // loop_exit
    _

// kernel: _lambda_.8
$region0: #{_lambda_.8}
  #allocation0 [shape = 'u32[]', space=smem, size = 0x4, offset = 0x4, fixed_abs, tag = 'smem constant byte address 0x4 - core index']
  #allocation1 [shape = 'u32[72,128]{1,0:T(1,128)}', space=vmem, size = 0x9000, scoped, tag = 'internal scratch']
  #allocation2 [shape = 'f32[1,1]{1,0:T(1,128)S(6)}', space=smem, size = 0x200, scoped, tag = 'scoped memory for _lambda_.8']
  %s0 = inlined_call_operand.vmem [shape: bf16[32,512], index: 0, kind: input, shape index: {}]
  %s1 = inlined_call_operand.vmem [shape: bf16[512,8], index: 1, kind: input, shape index: {}]
  %s2 = inlined_call_operand.vmem [shape: f32[1,8], index: 2, kind: input, shape index: {}]
  %s3 = inlined_call_operand.<no memory space> [shape: f32[1,1], index: 3, kind: input, shape index: {}]
  %s4 = inlined_call_operand.vmem [shape: bf16[32,8], index: 4, kind: input, shape index: {}]
  %s5 = inlined_call_operand.vmem [shape: bf16[32,8], index: 5, kind: output, shape index: {}]
  %s6 = sld [smem:[#allocation0]]
  $region53: #{_lambda_.8} parent=0
    _
  %s8 = ssub.s32 1, %s6
  %s9 = scalar_select 0, %s8, %s6
  %10 = sst [smem:[#allocation2]] %s3
  loop: start=0, step=1, limit=4
  $region2: #{_lambda_.8} parent=0 // loop_pre_header
    _
  $region3: #{_lambda_.8} parent=0 // loop_header
    %s12 = sphi 0, %s16
    %p13 = scmp.ge.s32.totalorder %s12, 4
    %s22 = sphi 0, %s24
    %s25 = sphi 0, %s22
    %s26 = sphi 0, %s25
    %s42 = sphi 0, %s26
    %s46 = sphi 0, %s46
    %s48 = sphi 0, %s46
    %s49 = sphi 0, %s48
    %s63 = sphi 0, %s49
    %s67 = sphi 0, %s67
    %s69 = sphi 0, %s67
    %s70 = sphi 0, %s69
    %s84 = sphi 0, %s70
    %s88 = sphi 0, %s88
    %s90 = sphi 0, %s88
    %s91 = sphi 0, %s90
    %s105 = sphi 0, %s91
    %s111 = sphi 0, %s113
    %s114 = sphi 0, %s111
    %s115 = sphi 0, %s114
    %s131 = sphi 0, %s115
    %s137 = sphi 0, %s139
    %s140 = sphi 0, %s137
    %s141 = sphi 0, %s140
    %s157 = sphi 0, %s141
  $region4: #{_lambda_.8} parent=0 // loop_header_branch
    %15 = sbr.rel (%p13) target = $region8
  $region5: #{_lambda_.8} parent=0 // loop_body
    %s17 = ssub.s32 %s12, 1
    %s18 = ssub.s32 %s12, 2
    %s19 = sadd.s32 %s12, 1
    %s20 = ssub.s32 %s12, %s19
    %p21 = scmp.eq.s32.totalorder %s20, 0
    %s23 = sadd.s32 %s22, 1
    %s24 = scalar_select %p21, %s22, %s23
    %p27 = pneg %p21
    %p28 = scmp.eq.s32.totalorder %s12, 1
    %p29 = por %p27, %p28
    %p30 = scmp.ne.s32.totalorder %s22, %s25
    %p31 = scmp.eq.s32.totalorder %s12, 0
    %p32 = por %p30, %p31
    %p33 = scmp.ne.s32.totalorder %s22, %s25
    %p34 = scmp.eq.s32.totalorder %s17, 1
    %p35 = por %p33, %p34
    %p36 = scmp.ne.s32.totalorder %s25, %s26
    %p37 = scmp.eq.s32.totalorder %s17, 0
    %p38 = por %p36, %p37
    %p39 = scmp.ne.s32.totalorder %s25, %s26
    %p40 = scmp.eq.s32.totalorder %s18, 1
    %p41 = por %p39, %p40
    %p43 = scmp.ne.s32.totalorder %s26, %s42
    %p44 = scmp.eq.s32.totalorder %s18, 0
    %p45 = por %p43, %p44
    %s47 = sadd.s32 %s46, 1
    %p50 = scmp.eq.s32.totalorder %s12, 1
    %p51 = scmp.ne.s32.totalorder %s46, %s48
    %p52 = scmp.eq.s32.totalorder %s12, 0
    %p53 = por %p51, %p52
    %p54 = scmp.ne.s32.totalorder %s46, %s48
    %p55 = scmp.eq.s32.totalorder %s17, 1
    %p56 = por %p54, %p55
    %p57 = scmp.ne.s32.totalorder %s48, %s49
    %p58 = scmp.eq.s32.totalorder %s17, 0
    %p59 = por %p57, %p58
    %p60 = scmp.ne.s32.totalorder %s48, %s49
    %p61 = scmp.eq.s32.totalorder %s18, 1
    %p62 = por %p60, %p61
    %p64 = scmp.ne.s32.totalorder %s49, %s63
    %p65 = scmp.eq.s32.totalorder %s18, 0
    %p66 = por %p64, %p65
    %s68 = sadd.s32 %s67, 1
    %p71 = scmp.eq.s32.totalorder %s12, 1
    %p72 = scmp.ne.s32.totalorder %s67, %s69
    %p73 = scmp.eq.s32.totalorder %s12, 0
    %p74 = por %p72, %p73
    %p75 = scmp.ne.s32.totalorder %s67, %s69
    %p76 = scmp.eq.s32.totalorder %s17, 1
    %p77 = por %p75, %p76
    %p78 = scmp.ne.s32.totalorder %s69, %s70
    %p79 = scmp.eq.s32.totalorder %s17, 0
    %p80 = por %p78, %p79
    %p81 = scmp.ne.s32.totalorder %s69, %s70
    %p82 = scmp.eq.s32.totalorder %s18, 1
    %p83 = por %p81, %p82
    %p85 = scmp.ne.s32.totalorder %s70, %s84
    %p86 = scmp.eq.s32.totalorder %s18, 0
    %p87 = por %p85, %p86
    %s89 = sadd.s32 %s88, 1
    %p92 = scmp.eq.s32.totalorder %s12, 1
    %p93 = scmp.ne.s32.totalorder %s88, %s90
    %p94 = scmp.eq.s32.totalorder %s12, 0
    %p95 = por %p93, %p94
    %p96 = scmp.ne.s32.totalorder %s88, %s90
    %p97 = scmp.eq.s32.totalorder %s17, 1
    %p98 = por %p96, %p97
    %p99 = scmp.ne.s32.totalorder %s90, %s91
    %p100 = scmp.eq.s32.totalorder %s17, 0
    %p101 = por %p99, %p100
    %p102 = scmp.ne.s32.totalorder %s90, %s91
    %p103 = scmp.eq.s32.totalorder %s18, 1
    %p104 = por %p102, %p103
    %p106 = scmp.ne.s32.totalorder %s91, %s105
    %p107 = scmp.eq.s32.totalorder %s18, 0
    %p108 = por %p106, %p107
    %s109 = ssub.s32 %s12, %s19
    %p110 = scmp.eq.s32.totalorder %s109, 0
    %s112 = sadd.s32 %s111, 1
    %s113 = scalar_select %p110, %s111, %s112
    %p116 = pneg %p110
    %p117 = scmp.eq.s32.totalorder %s12, 1
    %p118 = por %p116, %p117
    %p119 = scmp.ne.s32.totalorder %s111, %s114
    %p120 = scmp.eq.s32.totalorder %s12, 0
    %p121 = por %p119, %p120
    %p122 = scmp.ne.s32.totalorder %s111, %s114
    %p123 = scmp.eq.s32.totalorder %s17, 1
    %p124 = por %p122, %p123
    %p125 = scmp.ne.s32.totalorder %s114, %s115
    %p126 = scmp.eq.s32.totalorder %s17, 0
    %p127 = por %p125, %p126
    %p128 = scmp.ne.s32.totalorder %s114, %s115
    %p129 = scmp.eq.s32.totalorder %s18, 1
    %p130 = por %p128, %p129
    %p132 = scmp.ne.s32.totalorder %s115, %s131
    %p133 = scmp.eq.s32.totalorder %s18, 0
    %p134 = por %p132, %p133
    %s135 = ssub.s32 %s12, %s19
    %p136 = scmp.eq.s32.totalorder %s135, 0
    %s138 = sadd.s32 %s137, 1
    %s139 = scalar_select %p136, %s137, %s138
    %p142 = pneg %p136
    %p143 = scmp.eq.s32.totalorder %s12, 1
    %p144 = por %p142, %p143
    %p145 = scmp.ne.s32.totalorder %s137, %s140
    %p146 = scmp.eq.s32.totalorder %s12, 0
    %p147 = por %p145, %p146
    %p148 = scmp.ne.s32.totalorder %s137, %s140
    %p149 = scmp.eq.s32.totalorder %s17, 1
    %p150 = por %p148, %p149
    %p151 = scmp.ne.s32.totalorder %s140, %s141
    %p152 = scmp.eq.s32.totalorder %s17, 0
    %p153 = por %p151, %p152
    %p154 = scmp.ne.s32.totalorder %s140, %s141
    %p155 = scmp.eq.s32.totalorder %s18, 1
    %p156 = por %p154, %p155
    %p158 = scmp.ne.s32.totalorder %s141, %s157
    %p159 = scmp.eq.s32.totalorder %s18, 0
    %p160 = por %p158, %p159
    %p161 = scmp.le.s32.totalorder 1, %s12
    %p162 = scmp.lt.s32.totalorder %s12, 3
    %p163 = pnand %p161, %p162
    %p164 = pneg %p163
    // Predicated region
    $region9: #{_lambda_.8} parent=5 // pred_check
      _
    $region10: #{_lambda_.8} parent=5 // pred_check_branch
      %166 = sbr.rel (%p163) target = $region12
    $region11: #{_lambda_.8} parent=5 // pred_region
      %s167 = ssub.s32 %s12, 1
      // Predicated region
      $region13: #{_lambda_.8} parent=11 // pred_check
        %p168 = pneg %p59
      $region14: #{_lambda_.8} parent=11 // pred_check_branch
        %170 = sbr.rel (%p168) target = $region16
      $region15: #{_lambda_.8} parent=11 // pred_region
        _
      $region16: #{_lambda_.8} parent=11 // pred_fallthru
        _
      // Predicated region
      $region17: #{_lambda_.8} parent=11 // pred_check
        %p171 = pneg %p80
      $region18: #{_lambda_.8} parent=11 // pred_check_branch
        %173 = sbr.rel (%p171) target = $region20
      $region19: #{_lambda_.8} parent=11 // pred_region
        _
      $region20: #{_lambda_.8} parent=11 // pred_fallthru
        _
      // Predicated region
      $region21: #{_lambda_.8} parent=11 // pred_check
        %p174 = pneg %p101
      $region22: #{_lambda_.8} parent=11 // pred_check_branch
        %176 = sbr.rel (%p174) target = $region24
      $region23: #{_lambda_.8} parent=11 // pred_region
        _
      $region24: #{_lambda_.8} parent=11 // pred_fallthru
        _
    $region12: #{_lambda_.8} parent=5 // pred_fallthru
      _
    %p177 = scmp.lt.s32.totalorder %s12, 2
    // Predicated region
    $region25: #{_lambda_.8} parent=5 // pred_check
      %p178 = pneg %p177
    $region26: #{_lambda_.8} parent=5 // pred_check_branch
      %180 = sbr.rel (%p178) target = $region28
    $region27: #{_lambda_.8} parent=5 // pred_region
      // Predicated region
      $region29: #{_lambda_.8} parent=27 // pred_check
        %p181 = pneg %p32
      $region30: #{_lambda_.8} parent=27 // pred_check_branch
        %183 = sbr.rel (%p181) target = $region32
      $region31: #{_lambda_.8} parent=27 // pred_region
        %s184 = smul.u32 2, %s12
        %p185 = scmp.lt.s32.totalorder %s184, 3
        %s186 = scalar_select %p185, %s184, 3
        %s187 = smul.addr %s186, 4
        %s188 = smul.addr %s187, 4
        %s189 = scalar_lea.vmem %s0, %s188
        %s190 = smul.u32 2, %s12
      $region32: #{_lambda_.8} parent=27 // pred_fallthru
        _
      // Predicated region
      $region33: #{_lambda_.8} parent=27 // pred_check
        %p191 = pneg %p121
      $region34: #{_lambda_.8} parent=27 // pred_check_branch
        %193 = sbr.rel (%p191) target = $region36
      $region35: #{_lambda_.8} parent=27 // pred_region
        %s194 = smul.u32 2, %s12
        %p195 = scmp.lt.s32.totalorder %s194, 3
        %s196 = scalar_select %p195, %s194, 3
        %s197 = smul.addr %s196, 4
        %s198 = scalar_lea.vmem %s4, %s197
        %s199 = smul.u32 2, %s12
      $region36: #{_lambda_.8} parent=27 // pred_fallthru
        _
    $region28: #{_lambda_.8} parent=5 // pred_fallthru
      _
    %p200 = scmp.le.s32.totalorder 1, %s12
    %p201 = scmp.lt.s32.totalorder %s12, 3
    %p202 = pnand %p200, %p201
    %p203 = pneg %p202
    // Predicated region
    $region37: #{_lambda_.8} parent=5 // pred_check
      _
    $region38: #{_lambda_.8} parent=5 // pred_check_branch
      %205 = sbr.rel (%p202) target = $region40
    $region39: #{_lambda_.8} parent=5 // pred_region
      %s206 = ssub.s32 %s12, 1
      %s207 = smul.u32 2, %s17
      %p208 = scmp.lt.s32.totalorder %s207, 3
      %s209 = scalar_select %p208, %s207, 3
      %s210 = smul.addr %s209, 4
      %s211 = smul.addr %s210, 4
      %s212 = scalar_lea.vmem %s0, %s211
      %p213 = pneg %p38
      %p214 = pneg %p35
      %p215 = pneg %p59
      %p216 = pneg %p56
      %p217 = pneg %p80
      %p218 = pneg %p77
      %p219 = pneg %p101
      %p220 = pneg %p98
      %s221 = smul.u32 2, %s17
      %p222 = scmp.lt.s32.totalorder %s221, 3
      %s223 = scalar_select %p222, %s221, 3
      %s224 = smul.addr %s223, 4
      %s225 = scalar_lea.vmem %s4, %s224
      %p226 = pneg %p127
      %p227 = pneg %p124
      %p228 = pneg %p153
      %p229 = pneg %p150
      %s230 = smul.u32 2, %s17
      %p231 = scmp.lt.s32.totalorder %s230, 3
      %s232 = scalar_select %p231, %s230, 3
      %s233 = smul.addr %s232, 4
      %s234 = scalar_lea.vmem %s5, %s233
      %s235 = smul.u32 2, %s17
      %p236 = scmp.lt.s32.totalorder %s235, 3
      %s237 = scalar_select %p236, %s235, 3
      %s238 = smul.addr %s237, 4
      %s239 = smul.addr %s238, 4
      %s240 = scalar_lea.vmem %s0, %s239
      %s241 = smul.u32 2, %s17
      %s242 = smul.u32 2, %s17
      %p243 = scmp.lt.s32.totalorder %s242, 3
      %s244 = scalar_select %p243, %s242, 3
      %s245 = smul.addr %s244, 4
      %s246 = scalar_lea.vmem %s4, %s245
      %s247 = smul.u32 2, %s17
      %s248 = smul.u32 2, %s17
      %p249 = scmp.lt.s32.totalorder %s248, 3
      %s250 = scalar_select %p249, %s248, 3
      %s251 = smul.addr %s250, 4
      %s252 = scalar_lea.vmem %s5, %s251
      %s253 = smul.u32 2, %s17
      %v254 = vld [vmem:[%s240] sm:$0xff]
      %v255 = vld [vmem:[%s240 + $0x8] sm:$0xff]
      %v256 = vld [vmem:[%s240 + $0x10] sm:$0xff]
      %v257 = vld [vmem:[%s240 + $0x18] sm:$0xff]
      %v258 = vld [vmem:[%s1] sm:$0xf]
      %v259 = vld [vmem:[%s1 + $0x4] sm:$0xf]
      %v260 = vld [vmem:[%s1 + $0x8] sm:$0xf]
      %v261 = vld [vmem:[%s1 + $0xc] sm:$0xf]
      %v262 = vld [vmem:[%s1 + $0x10] sm:$0xf]
      %v263 = vld [vmem:[%s1 + $0x14] sm:$0xf]
      %v264 = vld [vmem:[%s1 + $0x18] sm:$0xf]
      %v265 = vld [vmem:[%s1 + $0x1c] sm:$0xf]
      %v266 = vld [vmem:[%s1 + $0x20] sm:$0xf]
      %v267 = vld [vmem:[%s1 + $0x24] sm:$0xf]
      %v268 = vld [vmem:[%s1 + $0x28] sm:$0xf]
      %v269 = vld [vmem:[%s1 + $0x2c] sm:$0xf]
      %v270 = vld [vmem:[%s1 + $0x30] sm:$0xf]
      %v271 = vld [vmem:[%s1 + $0x34] sm:$0xf]
      %v272 = vld [vmem:[%s1 + $0x38] sm:$0xf]
      %v273 = vld [vmem:[%s1 + $0x3c] sm:$0xf]
      %v274 = vld [vmem:[%s1 + $0x40] sm:$0xf]
      %v275 = vld [vmem:[%s1 + $0x44] sm:$0xf]
      %v276 = vld [vmem:[%s1 + $0x48] sm:$0xf]
      %v277 = vld [vmem:[%s1 + $0x4c] sm:$0xf]
      %v278 = vld [vmem:[%s1 + $0x50] sm:$0xf]
      %v279 = vld [vmem:[%s1 + $0x54] sm:$0xf]
      %v280 = vld [vmem:[%s1 + $0x58] sm:$0xf]
      %v281 = vld [vmem:[%s1 + $0x5c] sm:$0xf]
      %v282 = vld [vmem:[%s1 + $0x60] sm:$0xf]
      %v283 = vld [vmem:[%s1 + $0x64] sm:$0xf]
      %v284 = vld [vmem:[%s1 + $0x68] sm:$0xf]
      %v285 = vld [vmem:[%s1 + $0x6c] sm:$0xf]
      %v286 = vld [vmem:[%s1 + $0x70] sm:$0xf]
      %v287 = vld [vmem:[%s1 + $0x74] sm:$0xf]
      %v288 = vld [vmem:[%s1 + $0x78] sm:$0xf]
      %v289 = vld [vmem:[%s1 + $0x7c] sm:$0xf]
      %v290 = vld [vmem:[%s1 + $0x80] sm:$0xf]
      %v291 = vld [vmem:[%s1 + $0x84] sm:$0xf]
      %v292 = vld [vmem:[%s1 + $0x88] sm:$0xf]
      %v293 = vld [vmem:[%s1 + $0x8c] sm:$0xf]
      %v294 = vld [vmem:[%s1 + $0x90] sm:$0xf]
      %v295 = vld [vmem:[%s1 + $0x94] sm:$0xf]
      %v296 = vld [vmem:[%s1 + $0x98] sm:$0xf]
      %v297 = vld [vmem:[%s1 + $0x9c] sm:$0xf]
      %v298 = vld [vmem:[%s1 + $0xa0] sm:$0xf]
      %v299 = vld [vmem:[%s1 + $0xa4] sm:$0xf]
      %v300 = vld [vmem:[%s1 + $0xa8] sm:$0xf]
      %v301 = vld [vmem:[%s1 + $0xac] sm:$0xf]
      %v302 = vld [vmem:[%s1 + $0xb0] sm:$0xf]
      %v303 = vld [vmem:[%s1 + $0xb4] sm:$0xf]
      %v304 = vld [vmem:[%s1 + $0xb8] sm:$0xf]
      %v305 = vld [vmem:[%s1 + $0xbc] sm:$0xf]
      %v306 = vld [vmem:[%s1 + $0xc0] sm:$0xf]
      %v307 = vld [vmem:[%s1 + $0xc4] sm:$0xf]
      %v308 = vld [vmem:[%s1 + $0xc8] sm:$0xf]
      %v309 = vld [vmem:[%s1 + $0xcc] sm:$0xf]
      %v310 = vld [vmem:[%s1 + $0xd0] sm:$0xf]
      %v311 = vld [vmem:[%s1 + $0xd4] sm:$0xf]
      %v312 = vld [vmem:[%s1 + $0xd8] sm:$0xf]
      %v313 = vld [vmem:[%s1 + $0xdc] sm:$0xf]
      %v314 = vld [vmem:[%s1 + $0xe0] sm:$0xf]
      %v315 = vld [vmem:[%s1 + $0xe4] sm:$0xf]
      %v316 = vld [vmem:[%s1 + $0xe8] sm:$0xf]
      %v317 = vld [vmem:[%s1 + $0xec] sm:$0xf]
      %v318 = vld [vmem:[%s1 + $0xf0] sm:$0xf]
      %v319 = vld [vmem:[%s1 + $0xf4] sm:$0xf]
      %v320 = vld [vmem:[%s1 + $0xf8] sm:$0xf]
      %v321 = vld [vmem:[%s1 + $0xfc] sm:$0xf]
      %v322 = vld [vmem:[%s2] sm:$0x1]
      %s323 = sld [smem:[#allocation2]]
      %v324 = vld [vmem:[%s246] sm:$0xf]
      %v325 = vld [vmem:[%s246 + $0x4] sm:$0xf]
      %v327 = vperm.slane %v322, 0
      %v333 = vunpack.c.l.b16 %v254
      %v334 = vunpack.c.h.b16 %v254
      %v335 = vunpack.c.l.b16 %v255
      %v336 = vunpack.c.h.b16 %v255
      %v337 = vunpack.c.l.b16 %v256
      %v338 = vunpack.c.h.b16 %v256
      %v339 = vunpack.c.l.b16 %v257
      %v340 = vunpack.c.h.b16 %v257
      %v341 = vpack.c.b16 %v337, %v333
      %v342 = vpack.c.b16 %v338, %v334
      %v343 = vpack.c.b16 %v339, %v335
      %v344 = vpack.c.b16 %v340, %v336
      %v413 = vunpack.c.l.b16 %v258
      %v414 = vunpack.c.l.b16 %v259
      %v415 = vunpack.c.l.b16 %v260
      %v416 = vunpack.c.l.b16 %v261
      %v417 = vunpack.c.l.b16 %v262
      %v418 = vunpack.c.l.b16 %v263
      %v419 = vunpack.c.l.b16 %v264
      %v420 = vunpack.c.l.b16 %v265
      %v421 = vunpack.c.l.b16 %v266
      %v422 = vunpack.c.l.b16 %v267
      %v423 = vunpack.c.l.b16 %v268
      %v424 = vunpack.c.l.b16 %v269
      %v425 = vunpack.c.l.b16 %v270
      %v426 = vunpack.c.l.b16 %v271
      %v427 = vunpack.c.l.b16 %v272
      %v428 = vunpack.c.l.b16 %v273
      %v429 = vunpack.c.l.b16 %v274
      %v430 = vunpack.c.l.b16 %v275
      %v431 = vunpack.c.l.b16 %v276
      %v432 = vunpack.c.l.b16 %v277
      %v433 = vunpack.c.l.b16 %v278
      %v434 = vunpack.c.l.b16 %v279
      %v435 = vunpack.c.l.b16 %v280
      %v436 = vunpack.c.l.b16 %v281
      %v437 = vunpack.c.l.b16 %v282
      %v438 = vunpack.c.l.b16 %v283
      %v439 = vunpack.c.l.b16 %v284
      %v440 = vunpack.c.l.b16 %v285
      %v441 = vunpack.c.l.b16 %v286
      %v442 = vunpack.c.l.b16 %v287
      %v443 = vunpack.c.l.b16 %v288
      %v444 = vunpack.c.l.b16 %v289
      %v445 = vunpack.c.l.b16 %v290
      %v446 = vunpack.c.l.b16 %v291
      %v447 = vunpack.c.l.b16 %v292
      %v448 = vunpack.c.l.b16 %v293
      %v449 = vunpack.c.l.b16 %v294
      %v450 = vunpack.c.l.b16 %v295
      %v451 = vunpack.c.l.b16 %v296
      %v452 = vunpack.c.l.b16 %v297
      %v453 = vunpack.c.l.b16 %v298
      %v454 = vunpack.c.l.b16 %v299
      %v455 = vunpack.c.l.b16 %v300
      %v456 = vunpack.c.l.b16 %v301
      %v457 = vunpack.c.l.b16 %v302
      %v458 = vunpack.c.l.b16 %v303
      %v459 = vunpack.c.l.b16 %v304
      %v460 = vunpack.c.l.b16 %v305
      %v461 = vunpack.c.l.b16 %v306
      %v462 = vunpack.c.l.b16 %v307
      %v463 = vunpack.c.l.b16 %v308
      %v464 = vunpack.c.l.b16 %v309
      %v465 = vunpack.c.l.b16 %v310
      %v466 = vunpack.c.l.b16 %v311
      %v467 = vunpack.c.l.b16 %v312
      %v468 = vunpack.c.l.b16 %v313
      %v469 = vunpack.c.l.b16 %v314
      %v470 = vunpack.c.l.b16 %v315
      %v471 = vunpack.c.l.b16 %v316
      %v472 = vunpack.c.l.b16 %v317
      %v473 = vunpack.c.l.b16 %v318
      %v474 = vunpack.c.l.b16 %v319
      %v475 = vunpack.c.l.b16 %v320
      %v476 = vunpack.c.l.b16 %v321
      %v477 = vpack.c.b16 %v414, %v413
      %v478 = vpack.c.b16 %v416, %v415
      %v479 = vpack.c.b16 %v418, %v417
      %v480 = vpack.c.b16 %v420, %v419
      %v481 = vpack.c.b16 %v422, %v421
      %v482 = vpack.c.b16 %v424, %v423
      %v483 = vpack.c.b16 %v426, %v425
      %v484 = vpack.c.b16 %v428, %v427
      %v485 = vpack.c.b16 %v430, %v429
      %v486 = vpack.c.b16 %v432, %v431
      %v487 = vpack.c.b16 %v434, %v433
      %v488 = vpack.c.b16 %v436, %v435
      %v489 = vpack.c.b16 %v438, %v437
      %v490 = vpack.c.b16 %v440, %v439
      %v491 = vpack.c.b16 %v442, %v441
      %v492 = vpack.c.b16 %v444, %v443
      %v493 = vpack.c.b16 %v446, %v445
      %v494 = vpack.c.b16 %v448, %v447
      %v495 = vpack.c.b16 %v450, %v449
      %v496 = vpack.c.b16 %v452, %v451
      %v497 = vpack.c.b16 %v454, %v453
      %v498 = vpack.c.b16 %v456, %v455
      %v499 = vpack.c.b16 %v458, %v457
      %v500 = vpack.c.b16 %v460, %v459
      %v501 = vpack.c.b16 %v462, %v461
      %v502 = vpack.c.b16 %v464, %v463
      %v503 = vpack.c.b16 %v466, %v465
      %v504 = vpack.c.b16 %v468, %v467
      %v505 = vpack.c.b16 %v470, %v469
      %v506 = vpack.c.b16 %v472, %v471
      %v507 = vpack.c.b16 %v474, %v473
      %v508 = vpack.c.b16 %v476, %v475
      %541 = vmatpush.bf16.msra.mxu0 %v484
      %542 = vmatpush.bf16.msra.mxu0 %v483
      %543 = vmatpush.bf16.msra.mxu0 %v482
      %544 = vmatpush.bf16.msra.mxu0 %v481
      %545 = vmatpush.bf16.msra.mxu0 %v480
      %546 = vmatpush.bf16.msra.mxu0 %v479
      %547 = vmatpush.bf16.msra.mxu0 %v478
      %548 = vmatpush.bf16.msra.mxu0 %v477
      %549 = vmatmul.bf16.gmra.mxu0 %v341
      %v550 = vpop.f32.mrf.mxu0
      %v551 = vadd.f32 %v327, %v550
      %v552 = vpop.f32.mrf.mxu0
      %v553 = vadd.f32 %v327, %v552
      %554 = vdwg.mxu0
      %555 = vmatpush.bf16.msra.mxu0 %v492
      %556 = vmatpush.bf16.msra.mxu0 %v491
      %557 = vmatpush.bf16.msra.mxu0 %v490
      %558 = vmatpush.bf16.msra.mxu0 %v489
      %559 = vmatpush.bf16.msra.mxu0 %v488
      %560 = vmatpush.bf16.msra.mxu0 %v487
      %561 = vmatpush.bf16.msra.mxu0 %v486
      %562 = vmatpush.bf16.msra.mxu0 %v485
      %563 = vmatmul.bf16.gmra.mxu0 %v342
      %v564 = vpop.f32.mrf.mxu0
      %v565 = vadd.f32 %v551, %v564
      %v566 = vpop.f32.mrf.mxu0
      %v567 = vadd.f32 %v553, %v566
      %568 = vdwg.mxu0
      %569 = vmatpush.bf16.msra.mxu0 %v500
      %570 = vmatpush.bf16.msra.mxu0 %v499
      %571 = vmatpush.bf16.msra.mxu0 %v498
      %572 = vmatpush.bf16.msra.mxu0 %v497
      %573 = vmatpush.bf16.msra.mxu0 %v496
      %574 = vmatpush.bf16.msra.mxu0 %v495
      %575 = vmatpush.bf16.msra.mxu0 %v494
      %576 = vmatpush.bf16.msra.mxu0 %v493
      %577 = vmatmul.bf16.gmra.mxu0 %v343
      %v578 = vpop.f32.mrf.mxu0
      %v579 = vadd.f32 %v565, %v578
      %v580 = vpop.f32.mrf.mxu0
      %v581 = vadd.f32 %v567, %v580
      %582 = vdwg.mxu0
      %583 = vmatpush.bf16.msra.mxu0 %v508
      %584 = vmatpush.bf16.msra.mxu0 %v507
      %585 = vmatpush.bf16.msra.mxu0 %v506
      %586 = vmatpush.bf16.msra.mxu0 %v505
      %587 = vmatpush.bf16.msra.mxu0 %v504
      %588 = vmatpush.bf16.msra.mxu0 %v503
      %589 = vmatpush.bf16.msra.mxu0 %v502
      %590 = vmatpush.bf16.msra.mxu0 %v501
      %591 = vmatmul.bf16.gmra.mxu0 %v344
      %v592 = vpop.f32.mrf.mxu0
      %v593 = vadd.f32 %v579, %v592
      %v594 = vpop.f32.mrf.mxu0
      %v595 = vadd.f32 %v581, %v594
      %596 = vdwg.mxu0
      %vm597 = vcmp.gt.f32.partialorder %v593, 0.0
      %vm598 = vcmp.gt.f32.partialorder %v595, 0.0
      %v599 = vstv %s323
      %v600 = vmul.f32 %v599, %v593
      %v601 = vmul.f32 %v599, %v595
      %v602 = vsel %vm597, %v593, %v600
      %v603 = vsel %vm598, %v595, %v601
      %v604 = vunpack.c.l.bf16 %v324
      %v605 = vunpack.c.l.bf16 %v325
      %v606 = vsub.f32 %v602, %v604
      %v607 = vsub.f32 %v603, %v605
      %v608 = vpack.c.bf16 %v606, %v606
      %v609 = vpack.c.bf16 %v607, %v607
      %vm610 = vcmask 60416
      %611 = vst.msk [vmem:[%s252] sm:$0xf] %vm610, %v608
      %612 = vst.msk [vmem:[%s252 + $0x4] sm:$0xf] %vm610, %v609
      %s613 = smul.u32 2, %s17
      %p614 = scmp.lt.s32.totalorder %s613, 3
      %s615 = scalar_select %p614, %s613, 3
      %s616 = smul.addr %s615, 4
      %s617 = scalar_lea.vmem %s5, %s616
      // Predicated region
      $region41: #{_lambda_.8} parent=39 // pred_check
        %p618 = pneg %p150
      $region42: #{_lambda_.8} parent=39 // pred_check_branch
        %620 = sbr.rel (%p618) target = $region44
      $region43: #{_lambda_.8} parent=39 // pred_region
        %s621 = smul.u32 2, %s17
      $region44: #{_lambda_.8} parent=39 // pred_fallthru
        _
    $region40: #{_lambda_.8} parent=5 // pred_fallthru
      _
    %p622 = scmp.le.s32.totalorder 2, %s12
    // Predicated region
    $region45: #{_lambda_.8} parent=5 // pred_check
      %p623 = pneg %p622
    $region46: #{_lambda_.8} parent=5 // pred_check_branch
      %625 = sbr.rel (%p623) target = $region48
    $region47: #{_lambda_.8} parent=5 // pred_region
      %s626 = ssub.s32 %s12, 2
      // Predicated region
      $region49: #{_lambda_.8} parent=47 // pred_check
        %p627 = pneg %p156
      $region50: #{_lambda_.8} parent=47 // pred_check_branch
        %629 = sbr.rel (%p627) target = $region52
      $region51: #{_lambda_.8} parent=47 // pred_region
        %s630 = smul.u32 2, %s18
        %p631 = scmp.lt.s32.totalorder %s630, 3
        %s632 = scalar_select %p631, %s630, 3
        %s633 = smul.addr %s632, 4
        %s634 = scalar_lea.vmem %s5, %s633
      $region52: #{_lambda_.8} parent=47 // pred_fallthru
        _
    $region48: #{_lambda_.8} parent=5 // pred_fallthru
      _
  $region6: #{_lambda_.8} parent=0 // loop_footer
    %s16 = sadd.s32 1, %s12
  $region7: #{_lambda_.8} parent=0 // loop_footer_branch
    %11 = sbr.rel target = $region3
  $region8: #{_lambda_.8} parent=0 // loop_exit
    _

// kernel: _lambda_.9
$region0: #{_lambda_.9}
  #allocation0 [shape = 'u32[]', space=smem, size = 0x4, offset = 0x4, fixed_abs, tag = 'smem constant byte address 0x4 - core index']
  #allocation1 [shape = 'u32[72,128]{1,0:T(1,128)}', space=vmem, size = 0x9000, scoped, tag = 'internal scratch']
  #allocation2 [shape = 'f32[1,1]{1,0:T(1,128)S(6)}', space=smem, size = 0x200, scoped, tag = 'scoped memory for _lambda_.9']
  %s0 = inlined_call_operand.vmem [shape: bf16[32,128], index: 0, kind: input, shape index: {}]
  %s1 = inlined_call_operand.vmem [shape: bf16[128,128], index: 1, kind: input, shape index: {}]
  %s2 = inlined_call_operand.vmem [shape: f32[1,128], index: 2, kind: input, shape index: {}]
  %s3 = inlined_call_operand.<no memory space> [shape: f32[1,1], index: 3, kind: input, shape index: {}]
  %s4 = inlined_call_operand.vmem [shape: bf16[32,128], index: 4, kind: input, shape index: {}]
  %s5 = inlined_call_operand.vmem [shape: f32[32,128], index: 5, kind: output, shape index: {}]
  %s6 = sld [smem:[#allocation0]]
  $region53: #{_lambda_.9} parent=0
    _
  %s8 = ssub.s32 1, %s6
  %s9 = scalar_select 0, %s8, %s6
  %10 = sst [smem:[#allocation2]] %s3
  loop: start=0, step=1, limit=4
  $region2: #{_lambda_.9} parent=0 // loop_pre_header
    _
  $region3: #{_lambda_.9} parent=0 // loop_header
    %s12 = sphi 0, %s16
    %p13 = scmp.ge.s32.totalorder %s12, 4
    %s22 = sphi 0, %s24
    %s25 = sphi 0, %s22
    %s26 = sphi 0, %s25
    %s42 = sphi 0, %s26
    %s46 = sphi 0, %s46
    %s48 = sphi 0, %s46
    %s49 = sphi 0, %s48
    %s63 = sphi 0, %s49
    %s67 = sphi 0, %s67
    %s69 = sphi 0, %s67
    %s70 = sphi 0, %s69
    %s84 = sphi 0, %s70
    %s88 = sphi 0, %s88
    %s90 = sphi 0, %s88
    %s91 = sphi 0, %s90
    %s105 = sphi 0, %s91
    %s111 = sphi 0, %s113
    %s114 = sphi 0, %s111
    %s115 = sphi 0, %s114
    %s131 = sphi 0, %s115
    %s137 = sphi 0, %s139
    %s140 = sphi 0, %s137
    %s141 = sphi 0, %s140
    %s157 = sphi 0, %s141
  $region4: #{_lambda_.9} parent=0 // loop_header_branch
    %15 = sbr.rel (%p13) target = $region8
  $region5: #{_lambda_.9} parent=0 // loop_body
    %s17 = ssub.s32 %s12, 1
    %s18 = ssub.s32 %s12, 2
    %s19 = sadd.s32 %s12, 1
    %s20 = ssub.s32 %s12, %s19
    %p21 = scmp.eq.s32.totalorder %s20, 0
    %s23 = sadd.s32 %s22, 1
    %s24 = scalar_select %p21, %s22, %s23
    %p27 = pneg %p21
    %p28 = scmp.eq.s32.totalorder %s12, 1
    %p29 = por %p27, %p28
    %p30 = scmp.ne.s32.totalorder %s22, %s25
    %p31 = scmp.eq.s32.totalorder %s12, 0
    %p32 = por %p30, %p31
    %p33 = scmp.ne.s32.totalorder %s22, %s25
    %p34 = scmp.eq.s32.totalorder %s17, 1
    %p35 = por %p33, %p34
    %p36 = scmp.ne.s32.totalorder %s25, %s26
    %p37 = scmp.eq.s32.totalorder %s17, 0
    %p38 = por %p36, %p37
    %p39 = scmp.ne.s32.totalorder %s25, %s26
    %p40 = scmp.eq.s32.totalorder %s18, 1
    %p41 = por %p39, %p40
    %p43 = scmp.ne.s32.totalorder %s26, %s42
    %p44 = scmp.eq.s32.totalorder %s18, 0
    %p45 = por %p43, %p44
    %s47 = sadd.s32 %s46, 1
    %p50 = scmp.eq.s32.totalorder %s12, 1
    %p51 = scmp.ne.s32.totalorder %s46, %s48
    %p52 = scmp.eq.s32.totalorder %s12, 0
    %p53 = por %p51, %p52
    %p54 = scmp.ne.s32.totalorder %s46, %s48
    %p55 = scmp.eq.s32.totalorder %s17, 1
    %p56 = por %p54, %p55
    %p57 = scmp.ne.s32.totalorder %s48, %s49
    %p58 = scmp.eq.s32.totalorder %s17, 0
    %p59 = por %p57, %p58
    %p60 = scmp.ne.s32.totalorder %s48, %s49
    %p61 = scmp.eq.s32.totalorder %s18, 1
    %p62 = por %p60, %p61
    %p64 = scmp.ne.s32.totalorder %s49, %s63
    %p65 = scmp.eq.s32.totalorder %s18, 0
    %p66 = por %p64, %p65
    %s68 = sadd.s32 %s67, 1
    %p71 = scmp.eq.s32.totalorder %s12, 1
    %p72 = scmp.ne.s32.totalorder %s67, %s69
    %p73 = scmp.eq.s32.totalorder %s12, 0
    %p74 = por %p72, %p73
    %p75 = scmp.ne.s32.totalorder %s67, %s69
    %p76 = scmp.eq.s32.totalorder %s17, 1
    %p77 = por %p75, %p76
    %p78 = scmp.ne.s32.totalorder %s69, %s70
    %p79 = scmp.eq.s32.totalorder %s17, 0
    %p80 = por %p78, %p79
    %p81 = scmp.ne.s32.totalorder %s69, %s70
    %p82 = scmp.eq.s32.totalorder %s18, 1
    %p83 = por %p81, %p82
    %p85 = scmp.ne.s32.totalorder %s70, %s84
    %p86 = scmp.eq.s32.totalorder %s18, 0
    %p87 = por %p85, %p86
    %s89 = sadd.s32 %s88, 1
    %p92 = scmp.eq.s32.totalorder %s12, 1
    %p93 = scmp.ne.s32.totalorder %s88, %s90
    %p94 = scmp.eq.s32.totalorder %s12, 0
    %p95 = por %p93, %p94
    %p96 = scmp.ne.s32.totalorder %s88, %s90
    %p97 = scmp.eq.s32.totalorder %s17, 1
    %p98 = por %p96, %p97
    %p99 = scmp.ne.s32.totalorder %s90, %s91
    %p100 = scmp.eq.s32.totalorder %s17, 0
    %p101 = por %p99, %p100
    %p102 = scmp.ne.s32.totalorder %s90, %s91
    %p103 = scmp.eq.s32.totalorder %s18, 1
    %p104 = por %p102, %p103
    %p106 = scmp.ne.s32.totalorder %s91, %s105
    %p107 = scmp.eq.s32.totalorder %s18, 0
    %p108 = por %p106, %p107
    %s109 = ssub.s32 %s12, %s19
    %p110 = scmp.eq.s32.totalorder %s109, 0
    %s112 = sadd.s32 %s111, 1
    %s113 = scalar_select %p110, %s111, %s112
    %p116 = pneg %p110
    %p117 = scmp.eq.s32.totalorder %s12, 1
    %p118 = por %p116, %p117
    %p119 = scmp.ne.s32.totalorder %s111, %s114
    %p120 = scmp.eq.s32.totalorder %s12, 0
    %p121 = por %p119, %p120
    %p122 = scmp.ne.s32.totalorder %s111, %s114
    %p123 = scmp.eq.s32.totalorder %s17, 1
    %p124 = por %p122, %p123
    %p125 = scmp.ne.s32.totalorder %s114, %s115
    %p126 = scmp.eq.s32.totalorder %s17, 0
    %p127 = por %p125, %p126
    %p128 = scmp.ne.s32.totalorder %s114, %s115
    %p129 = scmp.eq.s32.totalorder %s18, 1
    %p130 = por %p128, %p129
    %p132 = scmp.ne.s32.totalorder %s115, %s131
    %p133 = scmp.eq.s32.totalorder %s18, 0
    %p134 = por %p132, %p133
    %s135 = ssub.s32 %s12, %s19
    %p136 = scmp.eq.s32.totalorder %s135, 0
    %s138 = sadd.s32 %s137, 1
    %s139 = scalar_select %p136, %s137, %s138
    %p142 = pneg %p136
    %p143 = scmp.eq.s32.totalorder %s12, 1
    %p144 = por %p142, %p143
    %p145 = scmp.ne.s32.totalorder %s137, %s140
    %p146 = scmp.eq.s32.totalorder %s12, 0
    %p147 = por %p145, %p146
    %p148 = scmp.ne.s32.totalorder %s137, %s140
    %p149 = scmp.eq.s32.totalorder %s17, 1
    %p150 = por %p148, %p149
    %p151 = scmp.ne.s32.totalorder %s140, %s141
    %p152 = scmp.eq.s32.totalorder %s17, 0
    %p153 = por %p151, %p152
    %p154 = scmp.ne.s32.totalorder %s140, %s141
    %p155 = scmp.eq.s32.totalorder %s18, 1
    %p156 = por %p154, %p155
    %p158 = scmp.ne.s32.totalorder %s141, %s157
    %p159 = scmp.eq.s32.totalorder %s18, 0
    %p160 = por %p158, %p159
    %p161 = scmp.le.s32.totalorder 1, %s12
    %p162 = scmp.lt.s32.totalorder %s12, 3
    %p163 = pnand %p161, %p162
    %p164 = pneg %p163
    // Predicated region
    $region9: #{_lambda_.9} parent=5 // pred_check
      _
    $region10: #{_lambda_.9} parent=5 // pred_check_branch
      %166 = sbr.rel (%p163) target = $region12
    $region11: #{_lambda_.9} parent=5 // pred_region
      %s167 = ssub.s32 %s12, 1
      // Predicated region
      $region13: #{_lambda_.9} parent=11 // pred_check
        %p168 = pneg %p59
      $region14: #{_lambda_.9} parent=11 // pred_check_branch
        %170 = sbr.rel (%p168) target = $region16
      $region15: #{_lambda_.9} parent=11 // pred_region
        _
      $region16: #{_lambda_.9} parent=11 // pred_fallthru
        _
      // Predicated region
      $region17: #{_lambda_.9} parent=11 // pred_check
        %p171 = pneg %p80
      $region18: #{_lambda_.9} parent=11 // pred_check_branch
        %173 = sbr.rel (%p171) target = $region20
      $region19: #{_lambda_.9} parent=11 // pred_region
        _
      $region20: #{_lambda_.9} parent=11 // pred_fallthru
        _
      // Predicated region
      $region21: #{_lambda_.9} parent=11 // pred_check
        %p174 = pneg %p101
      $region22: #{_lambda_.9} parent=11 // pred_check_branch
        %176 = sbr.rel (%p174) target = $region24
      $region23: #{_lambda_.9} parent=11 // pred_region
        _
      $region24: #{_lambda_.9} parent=11 // pred_fallthru
        _
    $region12: #{_lambda_.9} parent=5 // pred_fallthru
      _
    %p177 = scmp.lt.s32.totalorder %s12, 2
    // Predicated region
    $region25: #{_lambda_.9} parent=5 // pred_check
      %p178 = pneg %p177
    $region26: #{_lambda_.9} parent=5 // pred_check_branch
      %180 = sbr.rel (%p178) target = $region28
    $region27: #{_lambda_.9} parent=5 // pred_region
      // Predicated region
      $region29: #{_lambda_.9} parent=27 // pred_check
        %p181 = pneg %p32
      $region30: #{_lambda_.9} parent=27 // pred_check_branch
        %183 = sbr.rel (%p181) target = $region32
      $region31: #{_lambda_.9} parent=27 // pred_region
        %s184 = smul.u32 2, %s12
        %p185 = scmp.lt.s32.totalorder %s184, 3
        %s186 = scalar_select %p185, %s184, 3
        %s187 = smul.addr %s186, 4
        %s188 = scalar_lea.vmem %s0, %s187
        %s189 = smul.u32 2, %s12
      $region32: #{_lambda_.9} parent=27 // pred_fallthru
        _
      // Predicated region
      $region33: #{_lambda_.9} parent=27 // pred_check
        %p190 = pneg %p121
      $region34: #{_lambda_.9} parent=27 // pred_check_branch
        %192 = sbr.rel (%p190) target = $region36
      $region35: #{_lambda_.9} parent=27 // pred_region
        %s193 = smul.u32 2, %s12
        %p194 = scmp.lt.s32.totalorder %s193, 3
        %s195 = scalar_select %p194, %s193, 3
        %s196 = smul.addr %s195, 4
        %s197 = scalar_lea.vmem %s4, %s196
        %s198 = smul.u32 2, %s12
      $region36: #{_lambda_.9} parent=27 // pred_fallthru
        _
    $region28: #{_lambda_.9} parent=5 // pred_fallthru
      _
    %p199 = scmp.le.s32.totalorder 1, %s12
    %p200 = scmp.lt.s32.totalorder %s12, 3
    %p201 = pnand %p199, %p200
    %p202 = pneg %p201
    // Predicated region
    $region37: #{_lambda_.9} parent=5 // pred_check
      _
    $region38: #{_lambda_.9} parent=5 // pred_check_branch
      %204 = sbr.rel (%p201) target = $region40
    $region39: #{_lambda_.9} parent=5 // pred_region
      %s205 = ssub.s32 %s12, 1
      %s206 = smul.u32 2, %s17
      %p207 = scmp.lt.s32.totalorder %s206, 3
      %s208 = scalar_select %p207, %s206, 3
      %s209 = smul.addr %s208, 4
      %s210 = scalar_lea.vmem %s0, %s209
      %p211 = pneg %p38
      %p212 = pneg %p35
      %p213 = pneg %p59
      %p214 = pneg %p56
      %p215 = pneg %p80
      %p216 = pneg %p77
      %p217 = pneg %p101
      %p218 = pneg %p98
      %s219 = smul.u32 2, %s17
      %p220 = scmp.lt.s32.totalorder %s219, 3
      %s221 = scalar_select %p220, %s219, 3
      %s222 = smul.addr %s221, 4
      %s223 = scalar_lea.vmem %s4, %s222
      %p224 = pneg %p127
      %p225 = pneg %p124
      %p226 = pneg %p153
      %p227 = pneg %p150
      %s228 = smul.u32 2, %s17
      %p229 = scmp.lt.s32.totalorder %s228, 3
      %s230 = scalar_select %p229, %s228, 3
      %s231 = smul.addr %s230, 8
      %s232 = scalar_lea.vmem %s5, %s231
      %s233 = smul.u32 2, %s17
      %p234 = scmp.lt.s32.totalorder %s233, 3
      %s235 = scalar_select %p234, %s233, 3
      %s236 = smul.addr %s235, 4
      %s237 = scalar_lea.vmem %s0, %s236
      %s238 = smul.u32 2, %s17
      %s239 = smul.u32 2, %s17
      %p240 = scmp.lt.s32.totalorder %s239, 3
      %s241 = scalar_select %p240, %s239, 3
      %s242 = smul.addr %s241, 4
      %s243 = scalar_lea.vmem %s4, %s242
      %s244 = smul.u32 2, %s17
      %s245 = smul.u32 2, %s17
      %p246 = scmp.lt.s32.totalorder %s245, 3
      %s247 = scalar_select %p246, %s245, 3
      %s248 = smul.addr %s247, 8
      %s249 = scalar_lea.vmem %s5, %s248
      %s250 = smul.u32 2, %s17
      %v251 = vld [vmem:[%s237] sm:$0xf]
      %v252 = vld [vmem:[%s237 + $0x4] sm:$0xf]
      %v253 = vld [vmem:[%s1] sm:$0xf]
      %v254 = vld [vmem:[%s1 + $0x4] sm:$0xf]
      %v255 = vld [vmem:[%s1 + $0x8] sm:$0xf]
      %v256 = vld [vmem:[%s1 + $0xc] sm:$0xf]
      %v257 = vld [vmem:[%s1 + $0x10] sm:$0xf]
      %v258 = vld [vmem:[%s1 + $0x14] sm:$0xf]
      %v259 = vld [vmem:[%s1 + $0x18] sm:$0xf]
      %v260 = vld [vmem:[%s1 + $0x1c] sm:$0xf]
      %v261 = vld [vmem:[%s1 + $0x20] sm:$0xf]
      %v262 = vld [vmem:[%s1 + $0x24] sm:$0xf]
      %v263 = vld [vmem:[%s1 + $0x28] sm:$0xf]
      %v264 = vld [vmem:[%s1 + $0x2c] sm:$0xf]
      %v265 = vld [vmem:[%s1 + $0x30] sm:$0xf]
      %v266 = vld [vmem:[%s1 + $0x34] sm:$0xf]
      %v267 = vld [vmem:[%s1 + $0x38] sm:$0xf]
      %v268 = vld [vmem:[%s1 + $0x3c] sm:$0xf]
      %v269 = vld [vmem:[%s2] sm:$0x1]
      %s270 = sld [smem:[#allocation2]]
      %v271 = vld [vmem:[%s243] sm:$0xf]
      %v272 = vld [vmem:[%s243 + $0x4] sm:$0xf]
      %v274 = vperm.slane %v269, 0
      %v278 = vunpack.c.l.b16 %v251
      %v279 = vunpack.c.l.b16 %v252
      %v280 = vpack.c.b16 %v279, %v278
      %v298 = vunpack.c.l.b16 %v253
      %v299 = vunpack.c.l.b16 %v254
      %v300 = vunpack.c.l.b16 %v255
      %v301 = vunpack.c.l.b16 %v256
      %v302 = vunpack.c.l.b16 %v257
      %v303 = vunpack.c.l.b16 %v258
      %v304 = vunpack.c.l.b16 %v259
      %v305 = vunpack.c.l.b16 %v260
      %v306 = vunpack.c.l.b16 %v261
      %v307 = vunpack.c.l.b16 %v262
      %v308 = vunpack.c.l.b16 %v263
      %v309 = vunpack.c.l.b16 %v264
      %v310 = vunpack.c.l.b16 %v265
      %v311 = vunpack.c.l.b16 %v266
      %v312 = vunpack.c.l.b16 %v267
      %v313 = vunpack.c.l.b16 %v268
      %v314 = vpack.c.b16 %v299, %v298
      %v315 = vpack.c.b16 %v301, %v300
      %v316 = vpack.c.b16 %v303, %v302
      %v317 = vpack.c.b16 %v305, %v304
      %v318 = vpack.c.b16 %v307, %v306
      %v319 = vpack.c.b16 %v309, %v308
      %v320 = vpack.c.b16 %v311, %v310
      %v321 = vpack.c.b16 %v313, %v312
      %330 = vmatpush.bf16.msra.mxu0 %v321
      %331 = vmatpush.bf16.msra.mxu0 %v320
      %332 = vmatpush.bf16.msra.mxu0 %v319
      %333 = vmatpush.bf16.msra.mxu0 %v318
      %334 = vmatpush.bf16.msra.mxu0 %v317
      %335 = vmatpush.bf16.msra.mxu0 %v316
      %336 = vmatpush.bf16.msra.mxu0 %v315
      %337 = vmatpush.bf16.msra.mxu0 %v314
      %338 = vmatmul.bf16.gmra.mxu0 %v280
      %v339 = vpop.f32.mrf.mxu0
      %v340 = vadd.f32 %v274, %v339
      %v341 = vpop.f32.mrf.mxu0
      %v342 = vadd.f32 %v274, %v341
      %343 = vdwg.mxu0
      %vm344 = vcmp.gt.f32.partialorder %v340, 0.0
      %vm345 = vcmp.gt.f32.partialorder %v342, 0.0
      %v346 = vstv %s270
      %v347 = vmul.f32 %v346, %v340
      %v348 = vmul.f32 %v346, %v342
      %v349 = vsel %vm344, %v340, %v347
      %v350 = vsel %vm345, %v342, %v348
      %v351 = vunpack.c.l.bf16 %v271
      %v352 = vunpack.c.l.bf16 %v272
      %v353 = vmax.f32 %v349, 0.0
      %v354 = vmax.f32 %v350, 0.0
      %v355 = vmul.f32 %v353, 0.2
      %v356 = vmul.f32 %v354, 0.2
      %v357 = vmul.f32 %v355, %v351
      %v358 = vmul.f32 %v356, %v352
      %v359 = vadd.f32 %v351, %v357
      %v360 = vadd.f32 %v352, %v358
      %361 = vst [vmem:[%s249] sm:$0xff] %v359
      %362 = vst [vmem:[%s249 + $0x8] sm:$0xff] %v360
      %s363 = smul.u32 2, %s17
      %p364 = scmp.lt.s32.totalorder %s363, 3
      %s365 = scalar_select %p364, %s363, 3
      %s366 = smul.addr %s365, 8
      %s367 = scalar_lea.vmem %s5, %s366
      // Predicated region
      $region41: #{_lambda_.9} parent=39 // pred_check
        %p368 = pneg %p150
      $region42: #{_lambda_.9} parent=39 // pred_check_branch
        %370 = sbr.rel (%p368) target = $region44
      $region43: #{_lambda_.9} parent=39 // pred_region
        %s371 = smul.u32 2, %s17
      $region44: #{_lambda_.9} parent=39 // pred_fallthru
        _
    $region40: #{_lambda_.9} parent=5 // pred_fallthru
      _
    %p372 = scmp.le.s32.totalorder 2, %s12
    // Predicated region
    $region45: #{_lambda_.9} parent=5 // pred_check
      %p373 = pneg %p372
    $region46: #{_lambda_.9} parent=5 // pred_check_branch
      %375 = sbr.rel (%p373) target = $region48
    $region47: #{_lambda_.9} parent=5 // pred_region
      %s376 = ssub.s32 %s12, 2
      // Predicated region
      $region49: #{_lambda_.9} parent=47 // pred_check
        %p377 = pneg %p156
      $region50: #{_lambda_.9} parent=47 // pred_check_branch
        %379 = sbr.rel (%p377) target = $region52
      $region51: #{_lambda_.9} parent=47 // pred_region
        %s380 = smul.u32 2, %s18
        %p381 = scmp.lt.s32.totalorder %s380, 3
        %s382 = scalar_select %p381, %s380, 3
        %s383 = smul.addr %s382, 8
        %s384 = scalar_lea.vmem %s5, %s383
      $region52: #{_lambda_.9} parent=47 // pred_fallthru
        _
    $region48: #{_lambda_.9} parent=5 // pred_fallthru
      _
  $region6: #{_lambda_.9} parent=0 // loop_footer
    %s16 = sadd.s32 1, %s12
  $region7: #{_lambda_.9} parent=0 // loop_footer_branch
    %11 = sbr.rel target = $region3
  $region8: #{_lambda_.9} parent=0 // loop_exit
    _

</llo_original>
